<compile_context>
chip_gen: v5e
topology: v5e:2x2
jax: 0.10.0
libtpu: 0.0.40
codegen_flags: <defaults>
</compile_context>

<pallas_src>
import functools

import jax
import jax.numpy as jnp
from jax.experimental import pallas as pl
from jax.experimental.pallas import tpu as pltpu

LANE = 128         # TPU lane width
H1, H2 = 512, 256  # hidden sizes of the module


def _round_up(x, m):
    return (x + m - 1) // m * m


def _leaky_relu(x, slope=0.2):
    return jnp.where(x > 0, x, slope * x)


def color_mapper_kernel(x_ref, w1_ref, b1_ref, w2_ref, b2_ref, w3_ref, b3_ref,
                        o_ref):
    """Fused 3-layer MLP on one batch tile.

    All matmuls run on the MXU with bf16 operands and f32 accumulation; bias
    adds and LeakyReLU stay in f32.  The bf16 downcast is fused into the
    activation so only the bf16 intermediate remains live.  The output block
    is lane-dense (feature dim padded to 128) and bf16, so the final store is
    an unmasked, half-width vst.
    """
    cd = w1_ref.dtype
    x = x_ref[...].astype(cd)                                   # (tm, din) f32 -> bf16
    h1 = jnp.dot(x, w1_ref[...], preferred_element_type=jnp.float32)
    h1 = _leaky_relu(h1 + b1_ref[...]).astype(cd)               # (tm, 512) bf16
    h2 = jnp.dot(h1, w2_ref[...], preferred_element_type=jnp.float32)
    h2 = _leaky_relu(h2 + b2_ref[...]).astype(cd)               # (tm, 256) bf16
    h3 = jnp.dot(h2, w3_ref[...], preferred_element_type=jnp.float32)
    o_ref[...] = (h3 + b3_ref[...]).astype(o_ref.dtype)         # (tm, dout_p) bf16


@functools.partial(jax.jit, static_argnames=("tm", "compute_dtype"))
def color_mapper_forward(x, params, *, tm=1024, compute_dtype=jnp.bfloat16):
    w1, b1, w2, b2, w3, b3 = params
    n, din = x.shape
    dout = w3.shape[1]

    dout_p = _round_up(dout, LANE)   # lane-dense output -> unmasked stores
    cd = compute_dtype
    c_item = jnp.dtype(cd).itemsize

    # Tile selection (all shapes are static at trace time):
    #   * cap at 4096 so f32/bf16 intermediates stay inside v7x's 64 MiB VMEM,
    #   * shrink for small batches so the grid keeps >= 2 steps (v7x 2-TC
    #     parity under "parallel"); stay sublane(8)-aligned.
    tm = max(8, min(int(tm), 4096))
    tm = min(tm, max(8, _round_up(pl.cdiv(n, 2), 8)))
    grid = (pl.cdiv(n, tm),)

    # Cast weights to bf16 once at the boundary (tiny, ~0.4 MB total); biases
    # stay f32 (added to the f32 accumulator).  Only w3/b3 need lane padding.
    w1_c = w1.astype(cd)                                          # (din, 512)
    w2_c = w2.astype(cd)                                          # (512, 256)
    w3_p = jnp.pad(w3.astype(cd), ((0, 0), (0, dout_p - dout)))   # (256, dout_p)
    b1_f = b1.astype(jnp.float32).reshape(1, H1)
    b2_f = b2.astype(jnp.float32).reshape(1, H2)
    b3_p = jnp.pad(b3.astype(jnp.float32).reshape(1, dout),
                   ((0, 0), (0, dout_p - dout)))

    # Advisory cost estimate for XLA's scheduler.
    flops = 2 * n * (din * H1 + H1 * H2 + H2 * dout_p)
    bytes_accessed = (n * din * 4                                   # x (f32)
                      + n * dout_p * c_item                         # out (bf16)
                      + (w1_c.size + w2_c.size + w3_p.size) * c_item
                      + (b1_f.size + b2_f.size + b3_p.size) * 4)

    # VMEM budget: double-buffered x/out tiles, resident weights/biases
    # (conservatively counted double-buffered), live f32+bf16 intermediates.
    # Request 1.5x as headroom; floor 16 MiB, cap 48 MiB (v7x has 64 MiB/TC).
    vmem_bytes = (2 * tm * din * 4
                  + 2 * tm * dout_p * c_item
                  + 2 * (w1_c.size + w2_c.size + w3_p.size) * c_item
                  + 2 * (b1_f.size + b2_f.size + b3_p.size) * 4
                  + tm * (H1 + H2) * (4 + c_item))
    vmem_limit = int(min(max(3 * vmem_bytes // 2, 16 * 1024 * 1024),
                         48 * 1024 * 1024))

    out = pl.pallas_call(
        color_mapper_kernel,
        out_shape=jax.ShapeDtypeStruct((n, dout_p), cd),
        grid_spec=pltpu.PrefetchScalarGridSpec(
            num_scalar_prefetch=0,
            grid=grid,
            in_specs=[
                # x batch tile: last dim equals the full array dim, so the
                # (8,128) rule is satisfied without any feature padding.
                pl.BlockSpec((tm, din), lambda i: (i, 0)),
                # Weights/biases: constant index maps -> fetched once, stay
                # resident across the whole grid.
                # TODO(synk): pipeline_mode=pl.Buffered(1) on these would drop
                # the unused second buffer (~0.7 MiB); left at the default to
                # keep lowering maximally portable (budgeted for 2 buffers).
                pl.BlockSpec((din, H1), lambda i: (0, 0)),      # w1
                pl.BlockSpec((1, H1), lambda i: (0, 0)),        # b1
                pl.BlockSpec((H1, H2), lambda i: (0, 0)),       # w2
                pl.BlockSpec((1, H2), lambda i: (0, 0)),        # b2
                pl.BlockSpec((H2, dout_p), lambda i: (0, 0)),   # w3 (padded)
                pl.BlockSpec((1, dout_p), lambda i: (0, 0)),    # b3 (padded)
            ],
            out_specs=pl.BlockSpec((tm, dout_p), lambda i: (i, 0)),
        ),
        compiler_params=pltpu.CompilerParams(
            dimension_semantics=("parallel",),   # batch axis shards across TCs
            vmem_limit_bytes=vmem_limit),
        cost_estimate=pl.CostEstimate(
            flops=int(flops),
            transcendentals=0,
            bytes_accessed=int(bytes_accessed)),
    )(x, w1_c, b1_f, w2_c, b2_f, w3_p, b3_p)

    # Strip lane padding and restore the module's f32 output dtype.
    # TODO(synk): if profiling shows this slice as a standalone HBM pass,
    # return the padded (n, dout_p) bf16 block and slice/cast at the consumer.
    return out[:n, :dout].astype(jnp.float32)


def init_color_mapper_params(key, input_dim, output_dim):
    """Deterministic synthetic init (shapes match the PyTorch module)."""
    ks = jax.random.split(key, 6)
    # Stored as [in, out] (already transposed vs. PyTorch's [out, in]).
    w1 = jax.random.normal(ks[0], (input_dim, 512), jnp.float32) * 0.05
    b1 = jax.random.normal(ks[1], (1, 512), jnp.float32) * 0.01
    w2 = jax.random.normal(ks[2], (512, 256), jnp.float32) * 0.05
    b2 = jax.random.normal(ks[3], (1, 256), jnp.float32) * 0.01
    w3 = jax.random.normal(ks[4], (256, output_dim), jnp.float32) * 0.05
    b3 = jax.random.normal(ks[5], (1, output_dim), jnp.float32) * 0.01
    return (w1, b1, w2, b2, w3, b3)


def color_mapper_ref(x, params):
    """Pure-JAX f32 reference matching the PyTorch forward."""
    w1, b1, w2, b2, w3, b3 = params
    h = x @ w1 + b1
    h = jnp.where(h > 0, h, 0.2 * h)
    h = h @ w2 + b2
    h = jnp.where(h > 0, h, 0.2 * h)
    return h @ w3 + b3


if __name__ == "__main__":
    key = jax.random.PRNGKey(0)
    k_x, k_p = jax.random.split(key)

    input_dim, output_dim = 32, 3      # e.g. positional-encoded dir -> RGB
    batch = 300                        # ragged: exercises the masked trailing block

    x = jax.random.normal(k_x, (batch, input_dim), jnp.float32)
    params = init_color_mapper_params(k_p, input_dim, output_dim)

    # Default tm=1024 auto-shrinks to 152 here, giving a 2-step grid
    # (both v7x TensorCores busy) with a partial (148-row) trailing block.
    out = color_mapper_forward(x, params)
    out = jax.block_until_ready(out)

    ref = color_mapper_ref(x, params)
    assert out.shape == (batch, output_dim)
    max_err = float(jnp.max(jnp.abs(out - ref)))
    # bf16 matmul operands + bf16 output store (f32 accumulation) -> ~1% agreement.
    assert jnp.allclose(out, ref, atol=3e-2, rtol=3e-2), f"max abs err {max_err}"

    print("KERNEL_OK")
</pallas_src>

<mosaic_0001>
module attributes {stable_mosaic.version = 11 : i64} {
  func.func @color_mapper_kernel(%arg0: i32, %arg1: memref<152x32xf32, #tpu.memory_space<vmem>>, %arg2: memref<32x512xbf16, #tpu.memory_space<vmem>>, %arg3: memref<1x512xf32, #tpu.memory_space<vmem>>, %arg4: memref<512x256xbf16, #tpu.memory_space<vmem>>, %arg5: memref<1x256xf32, #tpu.memory_space<vmem>>, %arg6: memref<256x128xbf16, #tpu.memory_space<vmem>>, %arg7: memref<1x128xf32, #tpu.memory_space<vmem>>, %arg8: memref<152x128xbf16, #tpu.memory_space<vmem>>) attributes {dimension_semantics = [#tpu.dimension_semantics<parallel>], iteration_bounds = array<i64: 2>, scalar_prefetch = 0 : i64, scratch_operands = 0 : i64, tpu.core_type = #tpu.core_type<tc>, window_params = [{transform_indices = @transform_0, window_bounds = array<i64: 152, 32>}, {pipeline_mode = #tpu.pipeline_mode<synchronous>, transform_indices = @transform_1, window_bounds = array<i64: 32, 512>}, {pipeline_mode = #tpu.pipeline_mode<synchronous>, transform_indices = @transform_2, window_bounds = array<i64: 1, 512>}, {pipeline_mode = #tpu.pipeline_mode<synchronous>, transform_indices = @transform_3, window_bounds = array<i64: 512, 256>}, {pipeline_mode = #tpu.pipeline_mode<synchronous>, transform_indices = @transform_4, window_bounds = array<i64: 1, 256>}, {pipeline_mode = #tpu.pipeline_mode<synchronous>, transform_indices = @transform_5, window_bounds = array<i64: 256, 128>}, {pipeline_mode = #tpu.pipeline_mode<synchronous>, transform_indices = @transform_6, window_bounds = array<i64: 1, 128>}, {transform_indices = @transform_7, window_bounds = array<i64: 152, 128>}]} {
    %c0 = arith.constant 0 : index
    %c0_0 = arith.constant 0 : index
    %0 = vector.load %arg1[%c0, %c0_0] : memref<152x32xf32, #tpu.memory_space<vmem>>, vector<152x32xf32>
    %1 = arith.truncf %0 : vector<152x32xf32> to vector<152x32xbf16>
    %c0_1 = arith.constant 0 : index
    %c0_2 = arith.constant 0 : index
    %2 = vector.load %arg2[%c0_1, %c0_2] : memref<32x512xbf16, #tpu.memory_space<vmem>>, vector<32x512xbf16>
    %cst = arith.constant dense<0.000000e+00> : vector<152x512xf32>
    %3 = tpu.matmul %1, %2, %cst {dimension_numbers = #tpu.dot_dimension_numbers<[1], [0], [0], [1], [0, 0, 1, 1], [], []>} : vector<152x32xbf16>, vector<32x512xbf16>, vector<152x512xf32> -> vector<152x512xf32>
    %c0_3 = arith.constant 0 : index
    %c0_4 = arith.constant 0 : index
    %4 = vector.load %arg3[%c0_3, %c0_4] : memref<1x512xf32, #tpu.memory_space<vmem>>, vector<1x512xf32>
    %5 = vector.broadcast %4 : vector<1x512xf32> to vector<152x512xf32>
    %6 = arith.addf %3, %5 : vector<152x512xf32>
    %cst_5 = arith.constant 0.000000e+00 : f32
    %7 = vector.broadcast %cst_5 : f32 to vector<152x512xf32>
    %8 = arith.cmpf ogt, %6, %7 : vector<152x512xf32>
    %cst_6 = arith.constant 2.000000e-01 : f32
    %9 = vector.broadcast %cst_6 : f32 to vector<152x512xf32>
    %10 = arith.mulf %9, %6 : vector<152x512xf32>
    %11 = arith.select %8, %6, %10 : vector<152x512xi1>, vector<152x512xf32>
    %12 = arith.truncf %11 : vector<152x512xf32> to vector<152x512xbf16>
    %c0_7 = arith.constant 0 : index
    %c0_8 = arith.constant 0 : index
    %13 = vector.load %arg4[%c0_7, %c0_8] : memref<512x256xbf16, #tpu.memory_space<vmem>>, vector<512x256xbf16>
    %cst_9 = arith.constant dense<0.000000e+00> : vector<152x256xf32>
    %14 = tpu.matmul %12, %13, %cst_9 {dimension_numbers = #tpu.dot_dimension_numbers<[1], [0], [0], [1], [0, 0, 1, 1], [], []>} : vector<152x512xbf16>, vector<512x256xbf16>, vector<152x256xf32> -> vector<152x256xf32>
    %c0_10 = arith.constant 0 : index
    %c0_11 = arith.constant 0 : index
    %15 = vector.load %arg5[%c0_10, %c0_11] : memref<1x256xf32, #tpu.memory_space<vmem>>, vector<1x256xf32>
    %16 = vector.broadcast %15 : vector<1x256xf32> to vector<152x256xf32>
    %17 = arith.addf %14, %16 : vector<152x256xf32>
    %cst_12 = arith.constant 0.000000e+00 : f32
    %18 = vector.broadcast %cst_12 : f32 to vector<152x256xf32>
    %19 = arith.cmpf ogt, %17, %18 : vector<152x256xf32>
    %cst_13 = arith.constant 2.000000e-01 : f32
    %20 = vector.broadcast %cst_13 : f32 to vector<152x256xf32>
    %21 = arith.mulf %20, %17 : vector<152x256xf32>
    %22 = arith.select %19, %17, %21 : vector<152x256xi1>, vector<152x256xf32>
    %23 = arith.truncf %22 : vector<152x256xf32> to vector<152x256xbf16>
    %c0_14 = arith.constant 0 : index
    %c0_15 = arith.constant 0 : index
    %24 = vector.load %arg6[%c0_14, %c0_15] : memref<256x128xbf16, #tpu.memory_space<vmem>>, vector<256x128xbf16>
    %cst_16 = arith.constant dense<0.000000e+00> : vector<152x128xf32>
    %25 = tpu.matmul %23, %24, %cst_16 {dimension_numbers = #tpu.dot_dimension_numbers<[1], [0], [0], [1], [0, 0, 1, 1], [], []>} : vector<152x256xbf16>, vector<256x128xbf16>, vector<152x128xf32> -> vector<152x128xf32>
    %c0_17 = arith.constant 0 : index
    %c0_18 = arith.constant 0 : index
    %26 = vector.load %arg7[%c0_17, %c0_18] : memref<1x128xf32, #tpu.memory_space<vmem>>, vector<1x128xf32>
    %27 = vector.broadcast %26 : vector<1x128xf32> to vector<152x128xf32>
    %28 = arith.addf %25, %27 : vector<152x128xf32>
    %29 = arith.truncf %28 : vector<152x128xf32> to vector<152x128xbf16>
    %c0_19 = arith.constant 0 : index
    %c0_20 = arith.constant 0 : index
    %30 = vector.load %arg8[%c0_19, %c0_20] : memref<152x128xbf16, #tpu.memory_space<vmem>>, vector<152x128xbf16>
    tpu.vector_store %arg8[%c0_19, %c0_20], %29 {strides = array<i32>} : memref<152x128xbf16, #tpu.memory_space<vmem>>, vector<152x128xbf16>,
    return
  }
  func.func @transform_0(%arg0: i32) -> (i32, i32) {
    %c0_i32 = arith.constant 0 : i32
    %c0_i32_0 = arith.constant 0 : i32
    return %arg0, %c0_i32 : i32, i32
  }
  func.func @transform_1(%arg0: i32) -> (i32, i32) {
    %c0_i32 = arith.constant 0 : i32
    %c0_i32_0 = arith.constant 0 : i32
    %c0_i32_1 = arith.constant 0 : i32
    return %c0_i32, %c0_i32_0 : i32, i32
  }
  func.func @transform_2(%arg0: i32) -> (i32, i32) {
    %c0_i32 = arith.constant 0 : i32
    %c0_i32_0 = arith.constant 0 : i32
    %c0_i32_1 = arith.constant 0 : i32
    return %c0_i32, %c0_i32_0 : i32, i32
  }
  func.func @transform_3(%arg0: i32) -> (i32, i32) {
    %c0_i32 = arith.constant 0 : i32
    %c0_i32_0 = arith.constant 0 : i32
    %c0_i32_1 = arith.constant 0 : i32
    return %c0_i32, %c0_i32_0 : i32, i32
  }
  func.func @transform_4(%arg0: i32) -> (i32, i32) {
    %c0_i32 = arith.constant 0 : i32
    %c0_i32_0 = arith.constant 0 : i32
    %c0_i32_1 = arith.constant 0 : i32
    return %c0_i32, %c0_i32_0 : i32, i32
  }
  func.func @transform_5(%arg0: i32) -> (i32, i32) {
    %c0_i32 = arith.constant 0 : i32
    %c0_i32_0 = arith.constant 0 : i32
    %c0_i32_1 = arith.constant 0 : i32
    return %c0_i32, %c0_i32_0 : i32, i32
  }
  func.func @transform_6(%arg0: i32) -> (i32, i32) {
    %c0_i32 = arith.constant 0 : i32
    %c0_i32_0 = arith.constant 0 : i32
    %c0_i32_1 = arith.constant 0 : i32
    return %c0_i32, %c0_i32_0 : i32, i32
  }
  func.func @transform_7(%arg0: i32) -> (i32, i32) {
    %c0_i32 = arith.constant 0 : i32
    %c0_i32_0 = arith.constant 0 : i32
    return %arg0, %c0_i32 : i32, i32
  }
}

</mosaic_0001>

<llo_original>
// kernel: color_mapper_forward.1
$region0: #{color_mapper_forward.1}
  #allocation0 [shape = 'u32[]', space=smem, size = 0x4, offset = 0x4, fixed_abs, tag = 'smem constant byte address 0x4 - core index']
  #allocation1 [shape = 'u32[72,128]{1,0:T(1,128)}', space=vmem, size = 0x9000, scoped, tag = 'internal scratch']
  %s0 = inlined_call_operand.vmem [shape: f32[300,32], index: 0, kind: input, shape index: {}]
  %s1 = inlined_call_operand.vmem [shape: bf16[32,512], index: 1, kind: input, shape index: {}]
  %s2 = inlined_call_operand.vmem [shape: f32[1,512], index: 2, kind: input, shape index: {}]
  %s3 = inlined_call_operand.vmem [shape: bf16[512,256], index: 3, kind: input, shape index: {}]
  %s4 = inlined_call_operand.vmem [shape: f32[1,256], index: 4, kind: input, shape index: {}]
  %s5 = inlined_call_operand.vmem [shape: bf16[256,128], index: 5, kind: input, shape index: {}]
  %s6 = inlined_call_operand.vmem [shape: f32[1,128], index: 6, kind: input, shape index: {}]
  %s7 = inlined_call_operand.vmem [shape: bf16[300,128], index: 7, kind: output, shape index: {}]
  %s8 = sld [smem:[#allocation0]]
  $region61: #{color_mapper_forward.1} parent=0
    _
  %s10 = ssub.s32 1, %s8
  %s11 = scalar_select 0, %s10, %s8
  loop: start=0, step=1, limit=4
  $region2: #{color_mapper_forward.1} parent=0 // loop_pre_header
    _
  $region3: #{color_mapper_forward.1} parent=0 // loop_header
    %s13 = sphi 0, %s17
    %p14 = scmp.ge.s32.totalorder %s13, 4
    %s23 = sphi 0, %s25
    %s26 = sphi 0, %s23
    %s27 = sphi 0, %s26
    %s43 = sphi 0, %s27
    %s47 = sphi 0, %s47
    %s49 = sphi 0, %s47
    %s50 = sphi 0, %s49
    %s64 = sphi 0, %s50
    %s68 = sphi 0, %s68
    %s70 = sphi 0, %s68
    %s71 = sphi 0, %s70
    %s85 = sphi 0, %s71
    %s89 = sphi 0, %s89
    %s91 = sphi 0, %s89
    %s92 = sphi 0, %s91
    %s106 = sphi 0, %s92
    %s110 = sphi 0, %s110
    %s112 = sphi 0, %s110
    %s113 = sphi 0, %s112
    %s127 = sphi 0, %s113
    %s131 = sphi 0, %s131
    %s133 = sphi 0, %s131
    %s134 = sphi 0, %s133
    %s148 = sphi 0, %s134
    %s152 = sphi 0, %s152
    %s154 = sphi 0, %s152
    %s155 = sphi 0, %s154
    %s169 = sphi 0, %s155
    %s175 = sphi 0, %s177
    %s178 = sphi 0, %s175
    %s179 = sphi 0, %s178
    %s195 = sphi 0, %s179
  $region4: #{color_mapper_forward.1} parent=0 // loop_header_branch
    %16 = sbr.rel (%p14) target = $region8
  $region5: #{color_mapper_forward.1} parent=0 // loop_body
    %s18 = ssub.s32 %s13, 1
    %s19 = ssub.s32 %s13, 2
    %s20 = sadd.s32 %s13, 1
    %s21 = ssub.s32 %s13, %s20
    %p22 = scmp.eq.s32.totalorder %s21, 0
    %s24 = sadd.s32 %s23, 1
    %s25 = scalar_select %p22, %s23, %s24
    %p28 = pneg %p22
    %p29 = scmp.eq.s32.totalorder %s13, 1
    %p30 = por %p28, %p29
    %p31 = scmp.ne.s32.totalorder %s23, %s26
    %p32 = scmp.eq.s32.totalorder %s13, 0
    %p33 = por %p31, %p32
    %p34 = scmp.ne.s32.totalorder %s23, %s26
    %p35 = scmp.eq.s32.totalorder %s18, 1
    %p36 = por %p34, %p35
    %p37 = scmp.ne.s32.totalorder %s26, %s27
    %p38 = scmp.eq.s32.totalorder %s18, 0
    %p39 = por %p37, %p38
    %p40 = scmp.ne.s32.totalorder %s26, %s27
    %p41 = scmp.eq.s32.totalorder %s19, 1
    %p42 = por %p40, %p41
    %p44 = scmp.ne.s32.totalorder %s27, %s43
    %p45 = scmp.eq.s32.totalorder %s19, 0
    %p46 = por %p44, %p45
    %s48 = sadd.s32 %s47, 1
    %p51 = scmp.eq.s32.totalorder %s13, 1
    %p52 = scmp.ne.s32.totalorder %s47, %s49
    %p53 = scmp.eq.s32.totalorder %s13, 0
    %p54 = por %p52, %p53
    %p55 = scmp.ne.s32.totalorder %s47, %s49
    %p56 = scmp.eq.s32.totalorder %s18, 1
    %p57 = por %p55, %p56
    %p58 = scmp.ne.s32.totalorder %s49, %s50
    %p59 = scmp.eq.s32.totalorder %s18, 0
    %p60 = por %p58, %p59
    %p61 = scmp.ne.s32.totalorder %s49, %s50
    %p62 = scmp.eq.s32.totalorder %s19, 1
    %p63 = por %p61, %p62
    %p65 = scmp.ne.s32.totalorder %s50, %s64
    %p66 = scmp.eq.s32.totalorder %s19, 0
    %p67 = por %p65, %p66
    %s69 = sadd.s32 %s68, 1
    %p72 = scmp.eq.s32.totalorder %s13, 1
    %p73 = scmp.ne.s32.totalorder %s68, %s70
    %p74 = scmp.eq.s32.totalorder %s13, 0
    %p75 = por %p73, %p74
    %p76 = scmp.ne.s32.totalorder %s68, %s70
    %p77 = scmp.eq.s32.totalorder %s18, 1
    %p78 = por %p76, %p77
    %p79 = scmp.ne.s32.totalorder %s70, %s71
    %p80 = scmp.eq.s32.totalorder %s18, 0
    %p81 = por %p79, %p80
    %p82 = scmp.ne.s32.totalorder %s70, %s71
    %p83 = scmp.eq.s32.totalorder %s19, 1
    %p84 = por %p82, %p83
    %p86 = scmp.ne.s32.totalorder %s71, %s85
    %p87 = scmp.eq.s32.totalorder %s19, 0
    %p88 = por %p86, %p87
    %s90 = sadd.s32 %s89, 1
    %p93 = scmp.eq.s32.totalorder %s13, 1
    %p94 = scmp.ne.s32.totalorder %s89, %s91
    %p95 = scmp.eq.s32.totalorder %s13, 0
    %p96 = por %p94, %p95
    %p97 = scmp.ne.s32.totalorder %s89, %s91
    %p98 = scmp.eq.s32.totalorder %s18, 1
    %p99 = por %p97, %p98
    %p100 = scmp.ne.s32.totalorder %s91, %s92
    %p101 = scmp.eq.s32.totalorder %s18, 0
    %p102 = por %p100, %p101
    %p103 = scmp.ne.s32.totalorder %s91, %s92
    %p104 = scmp.eq.s32.totalorder %s19, 1
    %p105 = por %p103, %p104
    %p107 = scmp.ne.s32.totalorder %s92, %s106
    %p108 = scmp.eq.s32.totalorder %s19, 0
    %p109 = por %p107, %p108
    %s111 = sadd.s32 %s110, 1
    %p114 = scmp.eq.s32.totalorder %s13, 1
    %p115 = scmp.ne.s32.totalorder %s110, %s112
    %p116 = scmp.eq.s32.totalorder %s13, 0
    %p117 = por %p115, %p116
    %p118 = scmp.ne.s32.totalorder %s110, %s112
    %p119 = scmp.eq.s32.totalorder %s18, 1
    %p120 = por %p118, %p119
    %p121 = scmp.ne.s32.totalorder %s112, %s113
    %p122 = scmp.eq.s32.totalorder %s18, 0
    %p123 = por %p121, %p122
    %p124 = scmp.ne.s32.totalorder %s112, %s113
    %p125 = scmp.eq.s32.totalorder %s19, 1
    %p126 = por %p124, %p125
    %p128 = scmp.ne.s32.totalorder %s113, %s127
    %p129 = scmp.eq.s32.totalorder %s19, 0
    %p130 = por %p128, %p129
    %s132 = sadd.s32 %s131, 1
    %p135 = scmp.eq.s32.totalorder %s13, 1
    %p136 = scmp.ne.s32.totalorder %s131, %s133
    %p137 = scmp.eq.s32.totalorder %s13, 0
    %p138 = por %p136, %p137
    %p139 = scmp.ne.s32.totalorder %s131, %s133
    %p140 = scmp.eq.s32.totalorder %s18, 1
    %p141 = por %p139, %p140
    %p142 = scmp.ne.s32.totalorder %s133, %s134
    %p143 = scmp.eq.s32.totalorder %s18, 0
    %p144 = por %p142, %p143
    %p145 = scmp.ne.s32.totalorder %s133, %s134
    %p146 = scmp.eq.s32.totalorder %s19, 1
    %p147 = por %p145, %p146
    %p149 = scmp.ne.s32.totalorder %s134, %s148
    %p150 = scmp.eq.s32.totalorder %s19, 0
    %p151 = por %p149, %p150
    %s153 = sadd.s32 %s152, 1
    %p156 = scmp.eq.s32.totalorder %s13, 1
    %p157 = scmp.ne.s32.totalorder %s152, %s154
    %p158 = scmp.eq.s32.totalorder %s13, 0
    %p159 = por %p157, %p158
    %p160 = scmp.ne.s32.totalorder %s152, %s154
    %p161 = scmp.eq.s32.totalorder %s18, 1
    %p162 = por %p160, %p161
    %p163 = scmp.ne.s32.totalorder %s154, %s155
    %p164 = scmp.eq.s32.totalorder %s18, 0
    %p165 = por %p163, %p164
    %p166 = scmp.ne.s32.totalorder %s154, %s155
    %p167 = scmp.eq.s32.totalorder %s19, 1
    %p168 = por %p166, %p167
    %p170 = scmp.ne.s32.totalorder %s155, %s169
    %p171 = scmp.eq.s32.totalorder %s19, 0
    %p172 = por %p170, %p171
    %s173 = ssub.s32 %s13, %s20
    %p174 = scmp.eq.s32.totalorder %s173, 0
    %s176 = sadd.s32 %s175, 1
    %s177 = scalar_select %p174, %s175, %s176
    %p180 = pneg %p174
    %p181 = scmp.eq.s32.totalorder %s13, 1
    %p182 = por %p180, %p181
    %p183 = scmp.ne.s32.totalorder %s175, %s178
    %p184 = scmp.eq.s32.totalorder %s13, 0
    %p185 = por %p183, %p184
    %p186 = scmp.ne.s32.totalorder %s175, %s178
    %p187 = scmp.eq.s32.totalorder %s18, 1
    %p188 = por %p186, %p187
    %p189 = scmp.ne.s32.totalorder %s178, %s179
    %p190 = scmp.eq.s32.totalorder %s18, 0
    %p191 = por %p189, %p190
    %p192 = scmp.ne.s32.totalorder %s178, %s179
    %p193 = scmp.eq.s32.totalorder %s19, 1
    %p194 = por %p192, %p193
    %p196 = scmp.ne.s32.totalorder %s179, %s195
    %p197 = scmp.eq.s32.totalorder %s19, 0
    %p198 = por %p196, %p197
    %p199 = scmp.le.s32.totalorder 1, %s13
    %p200 = scmp.lt.s32.totalorder %s13, 3
    %p201 = pnand %p199, %p200
    %p202 = pneg %p201
    // Predicated region
    $region9: #{color_mapper_forward.1} parent=5 // pred_check
      _
    $region10: #{color_mapper_forward.1} parent=5 // pred_check_branch
      %204 = sbr.rel (%p201) target = $region12
    $region11: #{color_mapper_forward.1} parent=5 // pred_region
      %s205 = ssub.s32 %s13, 1
      // Predicated region
      $region13: #{color_mapper_forward.1} parent=11 // pred_check
        %p206 = pneg %p60
      $region14: #{color_mapper_forward.1} parent=11 // pred_check_branch
        %208 = sbr.rel (%p206) target = $region16
      $region15: #{color_mapper_forward.1} parent=11 // pred_region
        _
      $region16: #{color_mapper_forward.1} parent=11 // pred_fallthru
        _
      // Predicated region
      $region17: #{color_mapper_forward.1} parent=11 // pred_check
        %p209 = pneg %p81
      $region18: #{color_mapper_forward.1} parent=11 // pred_check_branch
        %211 = sbr.rel (%p209) target = $region20
      $region19: #{color_mapper_forward.1} parent=11 // pred_region
        _
      $region20: #{color_mapper_forward.1} parent=11 // pred_fallthru
        _
      // Predicated region
      $region21: #{color_mapper_forward.1} parent=11 // pred_check
        %p212 = pneg %p102
      $region22: #{color_mapper_forward.1} parent=11 // pred_check_branch
        %214 = sbr.rel (%p212) target = $region24
      $region23: #{color_mapper_forward.1} parent=11 // pred_region
        _
      $region24: #{color_mapper_forward.1} parent=11 // pred_fallthru
        _
      // Predicated region
      $region25: #{color_mapper_forward.1} parent=11 // pred_check
        %p215 = pneg %p123
      $region26: #{color_mapper_forward.1} parent=11 // pred_check_branch
        %217 = sbr.rel (%p215) target = $region28
      $region27: #{color_mapper_forward.1} parent=11 // pred_region
        _
      $region28: #{color_mapper_forward.1} parent=11 // pred_fallthru
        _
      // Predicated region
      $region29: #{color_mapper_forward.1} parent=11 // pred_check
        %p218 = pneg %p144
      $region30: #{color_mapper_forward.1} parent=11 // pred_check_branch
        %220 = sbr.rel (%p218) target = $region32
      $region31: #{color_mapper_forward.1} parent=11 // pred_region
        _
      $region32: #{color_mapper_forward.1} parent=11 // pred_fallthru
        _
      // Predicated region
      $region33: #{color_mapper_forward.1} parent=11 // pred_check
        %p221 = pneg %p165
      $region34: #{color_mapper_forward.1} parent=11 // pred_check_branch
        %223 = sbr.rel (%p221) target = $region36
      $region35: #{color_mapper_forward.1} parent=11 // pred_region
        _
      $region36: #{color_mapper_forward.1} parent=11 // pred_fallthru
        _
    $region12: #{color_mapper_forward.1} parent=5 // pred_fallthru
      _
    %p224 = scmp.lt.s32.totalorder %s13, 2
    // Predicated region
    $region37: #{color_mapper_forward.1} parent=5 // pred_check
      %p225 = pneg %p224
    $region38: #{color_mapper_forward.1} parent=5 // pred_check_branch
      %227 = sbr.rel (%p225) target = $region40
    $region39: #{color_mapper_forward.1} parent=5 // pred_region
      // Predicated region
      $region41: #{color_mapper_forward.1} parent=39 // pred_check
        %p228 = pneg %p33
      $region42: #{color_mapper_forward.1} parent=39 // pred_check_branch
        %230 = sbr.rel (%p228) target = $region44
      $region43: #{color_mapper_forward.1} parent=39 // pred_region
        %s231 = smul.u32 19, %s13
        %p232 = scmp.lt.s32.totalorder %s231, 37
        %s233 = scalar_select %p232, %s231, 37
        %s234 = smul.addr %s233, 8
        %s235 = scalar_lea.vmem %s0, %s234
        %s236 = smul.u32 19, %s13
      $region44: #{color_mapper_forward.1} parent=39 // pred_fallthru
        _
    $region40: #{color_mapper_forward.1} parent=5 // pred_fallthru
      _
    %p237 = scmp.le.s32.totalorder 1, %s13
    %p238 = scmp.lt.s32.totalorder %s13, 3
    %p239 = pnand %p237, %p238
    %p240 = pneg %p239
    // Predicated region
    $region45: #{color_mapper_forward.1} parent=5 // pred_check
      _
    $region46: #{color_mapper_forward.1} parent=5 // pred_check_branch
      %242 = sbr.rel (%p239) target = $region48
    $region47: #{color_mapper_forward.1} parent=5 // pred_region
      %s243 = ssub.s32 %s13, 1
      %s244 = smul.u32 19, %s18
      %p245 = scmp.lt.s32.totalorder %s244, 37
      %s246 = scalar_select %p245, %s244, 37
      %s247 = smul.addr %s246, 8
      %s248 = scalar_lea.vmem %s0, %s247
      %p249 = pneg %p39
      %p250 = pneg %p36
      %p251 = pneg %p60
      %p252 = pneg %p57
      %p253 = pneg %p81
      %p254 = pneg %p78
      %p255 = pneg %p102
      %p256 = pneg %p99
      %p257 = pneg %p123
      %p258 = pneg %p120
      %p259 = pneg %p144
      %p260 = pneg %p141
      %p261 = pneg %p165
      %p262 = pneg %p162
      %p263 = pneg %p191
      %p264 = pneg %p188
      %s265 = smul.u32 19, %s18
      %p266 = scmp.lt.s32.totalorder %s265, 37
      %s267 = scalar_select %p266, %s265, 37
      %s268 = smul.addr %s267, 4
      %s269 = scalar_lea.vmem %s7, %s268
      %s270 = smul.u32 19, %s18
      %p271 = scmp.lt.s32.totalorder %s270, 37
      %s272 = scalar_select %p271, %s270, 37
      %s273 = smul.addr %s272, 8
      %s274 = scalar_lea.vmem %s0, %s273
      %s275 = smul.u32 19, %s18
      %s276 = smul.u32 19, %s18
      %p277 = scmp.lt.s32.totalorder %s276, 37
      %s278 = scalar_select %p277, %s276, 37
      %s279 = smul.addr %s278, 4
      %s280 = scalar_lea.vmem %s7, %s279
      %s281 = smul.u32 19, %s18
      %v283 = vld [vmem:[%s274] sm:$0xff]
      %v284 = vld [vmem:[%s274 + $0x8] sm:$0xff]
      %v285 = vld [vmem:[%s274 + $0x10] sm:$0xff]
      %v286 = vld [vmem:[%s274 + $0x18] sm:$0xff]
      %v287 = vld [vmem:[%s274 + $0x20] sm:$0xff]
      %v288 = vld [vmem:[%s274 + $0x28] sm:$0xff]
      %v289 = vld [vmem:[%s274 + $0x30] sm:$0xff]
      %v290 = vld [vmem:[%s274 + $0x38] sm:$0xff]
      %v291 = vld [vmem:[%s274 + $0x40] sm:$0xff]
      %v292 = vld [vmem:[%s274 + $0x48] sm:$0xff]
      %v293 = vld [vmem:[%s274 + $0x50] sm:$0xff]
      %v294 = vld [vmem:[%s274 + $0x58] sm:$0xff]
      %v295 = vld [vmem:[%s274 + $0x60] sm:$0xff]
      %v296 = vld [vmem:[%s274 + $0x68] sm:$0xff]
      %v297 = vld [vmem:[%s274 + $0x70] sm:$0xff]
      %v298 = vld [vmem:[%s274 + $0x78] sm:$0xff]
      %v299 = vld [vmem:[%s274 + $0x80] sm:$0xff]
      %v300 = vld [vmem:[%s274 + $0x88] sm:$0xff]
      %v301 = vld [vmem:[%s274 + $0x90] sm:$0xff]
      %v302 = vpack.c.bf16 %v284, %v283
      %v303 = vpack.c.bf16 %v286, %v285
      %v304 = vpack.c.bf16 %v288, %v287
      %v305 = vpack.c.bf16 %v290, %v289
      %v306 = vpack.c.bf16 %v292, %v291
      %v307 = vpack.c.bf16 %v294, %v293
      %v308 = vpack.c.bf16 %v296, %v295
      %v309 = vpack.c.bf16 %v298, %v297
      %v310 = vpack.c.bf16 %v300, %v299
      %v311 = vpack.c.bf16 %v301, %v301
      %v312 = vld [vmem:[%s1] sm:$0xff]
      %v313 = vld [vmem:[%s1 + $0x8] sm:$0xff]
      %v314 = vld [vmem:[%s1 + $0x10] sm:$0xff]
      %v315 = vld [vmem:[%s1 + $0x18] sm:$0xff]
      %v316 = vld [vmem:[%s1 + $0x20] sm:$0xff]
      %v317 = vld [vmem:[%s1 + $0x28] sm:$0xff]
      %v318 = vld [vmem:[%s1 + $0x30] sm:$0xff]
      %v319 = vld [vmem:[%s1 + $0x38] sm:$0xff]
      %v320 = vld [vmem:[%s2] sm:$0xf]
      %v322 = vperm.slane %v320, 0
      %v323 = vperm.slane %v320, 1
      %v324 = vperm.slane %v320, 2
      %v325 = vperm.slane %v320, 3
      %v338 = vunpack.c.l.b16 %v312
      %v339 = vunpack.c.h.b16 %v312
      %v340 = vunpack.c.l.b16 %v313
      %v341 = vunpack.c.h.b16 %v313
      %v342 = vunpack.c.l.b16 %v314
      %v343 = vunpack.c.h.b16 %v314
      %v344 = vunpack.c.l.b16 %v315
      %v345 = vunpack.c.h.b16 %v315
      %v346 = vunpack.c.l.b16 %v316
      %v347 = vunpack.c.h.b16 %v316
      %v348 = vunpack.c.l.b16 %v317
      %v349 = vunpack.c.h.b16 %v317
      %v350 = vunpack.c.l.b16 %v318
      %v351 = vunpack.c.h.b16 %v318
      %v352 = vunpack.c.l.b16 %v319
      %v353 = vunpack.c.h.b16 %v319
      %v354 = vpack.c.b16 %v342, %v338
      %v355 = vpack.c.b16 %v343, %v339
      %v356 = vpack.c.b16 %v344, %v340
      %v357 = vpack.c.b16 %v345, %v341
      %v358 = vpack.c.b16 %v350, %v346
      %v359 = vpack.c.b16 %v351, %v347
      %v360 = vpack.c.b16 %v352, %v348
      %v361 = vpack.c.b16 %v353, %v349
      %vm370 = vcmask 261120
      %v372 = vsel %vm370, %v302, 0
      %v375 = vsel %vm370, %v303, 0
      %v378 = vsel %vm370, %v304, 0
      %v381 = vsel %vm370, %v305, 0
      %v384 = vsel %vm370, %v306, 0
      %v387 = vsel %vm370, %v307, 0
      %v390 = vsel %vm370, %v308, 0
      %v393 = vsel %vm370, %v309, 0
      %v396 = vsel %vm370, %v310, 0
      %v399 = vsel %vm370, %v311, 0
      %401 = vmatpush.bf16.msra.mxu0 0
      %402 = vmatpush.bf16.msra.mxu0 0
      %403 = vmatpush.bf16.msra.mxu0 0
      %404 = vmatpush.bf16.msra.mxu0 0
      %405 = vmatpush.bf16.msra.mxu0 0
      %406 = vmatpush.bf16.msra.mxu0 0
      %407 = vmatpush.bf16.msra.mxu0 %v358
      %408 = vmatpush.bf16.msra.mxu0 %v354
      %409 = vmatmul.bf16.gmra.mxu0 %v372
      %v410 = vpop.f32.mrf.mxu0
      %v411 = vadd.f32 %v322, %v410
      %v412 = vpop.f32.mrf.mxu0
      %v413 = vadd.f32 %v322, %v412
      %414 = vmatmul.bf16.gmra.mxu0 %v375
      %v415 = vpop.f32.mrf.mxu0
      %v416 = vadd.f32 %v322, %v415
      %v417 = vpop.f32.mrf.mxu0
      %v418 = vadd.f32 %v322, %v417
      %419 = vmatmul.bf16.gmra.mxu0 %v378
      %v420 = vpop.f32.mrf.mxu0
      %v421 = vadd.f32 %v322, %v420
      %v422 = vpop.f32.mrf.mxu0
      %v423 = vadd.f32 %v322, %v422
      %424 = vmatmul.bf16.gmra.mxu0 %v381
      %v425 = vpop.f32.mrf.mxu0
      %v426 = vadd.f32 %v322, %v425
      %v427 = vpop.f32.mrf.mxu0
      %v428 = vadd.f32 %v322, %v427
      %429 = vmatmul.bf16.gmra.mxu0 %v384
      %v430 = vpop.f32.mrf.mxu0
      %v431 = vadd.f32 %v322, %v430
      %v432 = vpop.f32.mrf.mxu0
      %v433 = vadd.f32 %v322, %v432
      %434 = vmatmul.bf16.gmra.mxu0 %v387
      %v435 = vpop.f32.mrf.mxu0
      %v436 = vadd.f32 %v322, %v435
      %v437 = vpop.f32.mrf.mxu0
      %v438 = vadd.f32 %v322, %v437
      %439 = vmatmul.bf16.gmra.mxu0 %v390
      %v440 = vpop.f32.mrf.mxu0
      %v441 = vadd.f32 %v322, %v440
      %v442 = vpop.f32.mrf.mxu0
      %v443 = vadd.f32 %v322, %v442
      %444 = vmatmul.bf16.gmra.mxu0 %v393
      %v445 = vpop.f32.mrf.mxu0
      %v446 = vadd.f32 %v322, %v445
      %v447 = vpop.f32.mrf.mxu0
      %v448 = vadd.f32 %v322, %v447
      %449 = vmatmul.bf16.gmra.mxu0 %v396
      %v450 = vpop.f32.mrf.mxu0
      %v451 = vadd.f32 %v322, %v450
      %v452 = vpop.f32.mrf.mxu0
      %v453 = vadd.f32 %v322, %v452
      %454 = vmatmul.bf16.gmra.mxu0 %v399
      %v455 = vpop.f32.mrf.mxu0
      %v456 = vadd.f32 %v322, %v455
      %v457 = vpop.f32.mrf.mxu0
      %458 = vdwg.mxu0
      %459 = vmatpush.bf16.msra.mxu0 0
      %460 = vmatpush.bf16.msra.mxu0 0
      %461 = vmatpush.bf16.msra.mxu0 0
      %462 = vmatpush.bf16.msra.mxu0 0
      %463 = vmatpush.bf16.msra.mxu0 0
      %464 = vmatpush.bf16.msra.mxu0 0
      %465 = vmatpush.bf16.msra.mxu0 %v359
      %466 = vmatpush.bf16.msra.mxu0 %v355
      %467 = vmatmul.bf16.gmra.mxu0 %v372
      %v468 = vpop.f32.mrf.mxu0
      %v469 = vadd.f32 %v323, %v468
      %v470 = vpop.f32.mrf.mxu0
      %v471 = vadd.f32 %v323, %v470
      %472 = vmatmul.bf16.gmra.mxu0 %v375
      %v473 = vpop.f32.mrf.mxu0
      %v474 = vadd.f32 %v323, %v473
      %v475 = vpop.f32.mrf.mxu0
      %v476 = vadd.f32 %v323, %v475
      %477 = vmatmul.bf16.gmra.mxu0 %v378
      %v478 = vpop.f32.mrf.mxu0
      %v479 = vadd.f32 %v323, %v478
      %v480 = vpop.f32.mrf.mxu0
      %v481 = vadd.f32 %v323, %v480
      %482 = vmatmul.bf16.gmra.mxu0 %v381
      %v483 = vpop.f32.mrf.mxu0
      %v484 = vadd.f32 %v323, %v483
      %v485 = vpop.f32.mrf.mxu0
      %v486 = vadd.f32 %v323, %v485
      %487 = vmatmul.bf16.gmra.mxu0 %v384
      %v488 = vpop.f32.mrf.mxu0
      %v489 = vadd.f32 %v323, %v488
      %v490 = vpop.f32.mrf.mxu0
      %v491 = vadd.f32 %v323, %v490
      %492 = vmatmul.bf16.gmra.mxu0 %v387
      %v493 = vpop.f32.mrf.mxu0
      %v494 = vadd.f32 %v323, %v493
      %v495 = vpop.f32.mrf.mxu0
      %v496 = vadd.f32 %v323, %v495
      %497 = vmatmul.bf16.gmra.mxu0 %v390
      %v498 = vpop.f32.mrf.mxu0
      %v499 = vadd.f32 %v323, %v498
      %v500 = vpop.f32.mrf.mxu0
      %v501 = vadd.f32 %v323, %v500
      %502 = vmatmul.bf16.gmra.mxu0 %v393
      %v503 = vpop.f32.mrf.mxu0
      %v504 = vadd.f32 %v323, %v503
      %v505 = vpop.f32.mrf.mxu0
      %v506 = vadd.f32 %v323, %v505
      %507 = vmatmul.bf16.gmra.mxu0 %v396
      %v508 = vpop.f32.mrf.mxu0
      %v509 = vadd.f32 %v323, %v508
      %v510 = vpop.f32.mrf.mxu0
      %v511 = vadd.f32 %v323, %v510
      %512 = vmatmul.bf16.gmra.mxu0 %v399
      %v513 = vpop.f32.mrf.mxu0
      %v514 = vadd.f32 %v323, %v513
      %v515 = vpop.f32.mrf.mxu0
      %516 = vdwg.mxu0
      %517 = vmatpush.bf16.msra.mxu0 0
      %518 = vmatpush.bf16.msra.mxu0 0
      %519 = vmatpush.bf16.msra.mxu0 0
      %520 = vmatpush.bf16.msra.mxu0 0
      %521 = vmatpush.bf16.msra.mxu0 0
      %522 = vmatpush.bf16.msra.mxu0 0
      %523 = vmatpush.bf16.msra.mxu0 %v360
      %524 = vmatpush.bf16.msra.mxu0 %v356
      %525 = vmatmul.bf16.gmra.mxu0 %v372
      %v526 = vpop.f32.mrf.mxu0
      %v527 = vadd.f32 %v324, %v526
      %v528 = vpop.f32.mrf.mxu0
      %v529 = vadd.f32 %v324, %v528
      %530 = vmatmul.bf16.gmra.mxu0 %v375
      %v531 = vpop.f32.mrf.mxu0
      %v532 = vadd.f32 %v324, %v531
      %v533 = vpop.f32.mrf.mxu0
      %v534 = vadd.f32 %v324, %v533
      %535 = vmatmul.bf16.gmra.mxu0 %v378
      %v536 = vpop.f32.mrf.mxu0
      %v537 = vadd.f32 %v324, %v536
      %v538 = vpop.f32.mrf.mxu0
      %v539 = vadd.f32 %v324, %v538
      %540 = vmatmul.bf16.gmra.mxu0 %v381
      %v541 = vpop.f32.mrf.mxu0
      %v542 = vadd.f32 %v324, %v541
      %v543 = vpop.f32.mrf.mxu0
      %v544 = vadd.f32 %v324, %v543
      %545 = vmatmul.bf16.gmra.mxu0 %v384
      %v546 = vpop.f32.mrf.mxu0
      %v547 = vadd.f32 %v324, %v546
      %v548 = vpop.f32.mrf.mxu0
      %v549 = vadd.f32 %v324, %v548
      %550 = vmatmul.bf16.gmra.mxu0 %v387
      %v551 = vpop.f32.mrf.mxu0
      %v552 = vadd.f32 %v324, %v551
      %v553 = vpop.f32.mrf.mxu0
      %v554 = vadd.f32 %v324, %v553
      %555 = vmatmul.bf16.gmra.mxu0 %v390
      %v556 = vpop.f32.mrf.mxu0
      %v557 = vadd.f32 %v324, %v556
      %v558 = vpop.f32.mrf.mxu0
      %v559 = vadd.f32 %v324, %v558
      %560 = vmatmul.bf16.gmra.mxu0 %v393
      %v561 = vpop.f32.mrf.mxu0
      %v562 = vadd.f32 %v324, %v561
      %v563 = vpop.f32.mrf.mxu0
      %v564 = vadd.f32 %v324, %v563
      %565 = vmatmul.bf16.gmra.mxu0 %v396
      %v566 = vpop.f32.mrf.mxu0
      %v567 = vadd.f32 %v324, %v566
      %v568 = vpop.f32.mrf.mxu0
      %v569 = vadd.f32 %v324, %v568
      %570 = vmatmul.bf16.gmra.mxu0 %v399
      %v571 = vpop.f32.mrf.mxu0
      %v572 = vadd.f32 %v324, %v571
      %v573 = vpop.f32.mrf.mxu0
      %574 = vdwg.mxu0
      %575 = vmatpush.bf16.msra.mxu0 0
      %576 = vmatpush.bf16.msra.mxu0 0
      %577 = vmatpush.bf16.msra.mxu0 0
      %578 = vmatpush.bf16.msra.mxu0 0
      %579 = vmatpush.bf16.msra.mxu0 0
      %580 = vmatpush.bf16.msra.mxu0 0
      %581 = vmatpush.bf16.msra.mxu0 %v361
      %582 = vmatpush.bf16.msra.mxu0 %v357
      %583 = vmatmul.bf16.gmra.mxu0 %v372
      %v584 = vpop.f32.mrf.mxu0
      %v585 = vadd.f32 %v325, %v584
      %v586 = vpop.f32.mrf.mxu0
      %v587 = vadd.f32 %v325, %v586
      %588 = vmatmul.bf16.gmra.mxu0 %v375
      %v589 = vpop.f32.mrf.mxu0
      %v590 = vadd.f32 %v325, %v589
      %v591 = vpop.f32.mrf.mxu0
      %v592 = vadd.f32 %v325, %v591
      %593 = vmatmul.bf16.gmra.mxu0 %v378
      %v594 = vpop.f32.mrf.mxu0
      %v595 = vadd.f32 %v325, %v594
      %v596 = vpop.f32.mrf.mxu0
      %v597 = vadd.f32 %v325, %v596
      %598 = vmatmul.bf16.gmra.mxu0 %v381
      %v599 = vpop.f32.mrf.mxu0
      %v600 = vadd.f32 %v325, %v599
      %v601 = vpop.f32.mrf.mxu0
      %v602 = vadd.f32 %v325, %v601
      %603 = vmatmul.bf16.gmra.mxu0 %v384
      %v604 = vpop.f32.mrf.mxu0
      %v605 = vadd.f32 %v325, %v604
      %v606 = vpop.f32.mrf.mxu0
      %v607 = vadd.f32 %v325, %v606
      %608 = vmatmul.bf16.gmra.mxu0 %v387
      %v609 = vpop.f32.mrf.mxu0
      %v610 = vadd.f32 %v325, %v609
      %v611 = vpop.f32.mrf.mxu0
      %v612 = vadd.f32 %v325, %v611
      %613 = vmatmul.bf16.gmra.mxu0 %v390
      %v614 = vpop.f32.mrf.mxu0
      %v615 = vadd.f32 %v325, %v614
      %v616 = vpop.f32.mrf.mxu0
      %v617 = vadd.f32 %v325, %v616
      %618 = vmatmul.bf16.gmra.mxu0 %v393
      %v619 = vpop.f32.mrf.mxu0
      %v620 = vadd.f32 %v325, %v619
      %v621 = vpop.f32.mrf.mxu0
      %v622 = vadd.f32 %v325, %v621
      %623 = vmatmul.bf16.gmra.mxu0 %v396
      %v624 = vpop.f32.mrf.mxu0
      %v625 = vadd.f32 %v325, %v624
      %v626 = vpop.f32.mrf.mxu0
      %v627 = vadd.f32 %v325, %v626
      %628 = vmatmul.bf16.gmra.mxu0 %v399
      %v629 = vpop.f32.mrf.mxu0
      %v630 = vadd.f32 %v325, %v629
      %v631 = vpop.f32.mrf.mxu0
      %632 = vdwg.mxu0
      %vm633 = vcmp.gt.f32.partialorder %v411, 0.0
      %vm634 = vcmp.gt.f32.partialorder %v469, 0.0
      %vm635 = vcmp.gt.f32.partialorder %v527, 0.0
      %vm636 = vcmp.gt.f32.partialorder %v585, 0.0
      %vm637 = vcmp.gt.f32.partialorder %v413, 0.0
      %vm638 = vcmp.gt.f32.partialorder %v471, 0.0
      %vm639 = vcmp.gt.f32.partialorder %v529, 0.0
      %vm640 = vcmp.gt.f32.partialorder %v587, 0.0
      %vm641 = vcmp.gt.f32.partialorder %v416, 0.0
      %vm642 = vcmp.gt.f32.partialorder %v474, 0.0
      %vm643 = vcmp.gt.f32.partialorder %v532, 0.0
      %vm644 = vcmp.gt.f32.partialorder %v590, 0.0
      %vm645 = vcmp.gt.f32.partialorder %v418, 0.0
      %vm646 = vcmp.gt.f32.partialorder %v476, 0.0
      %vm647 = vcmp.gt.f32.partialorder %v534, 0.0
      %vm648 = vcmp.gt.f32.partialorder %v592, 0.0
      %vm649 = vcmp.gt.f32.partialorder %v421, 0.0
      %vm650 = vcmp.gt.f32.partialorder %v479, 0.0
      %vm651 = vcmp.gt.f32.partialorder %v537, 0.0
      %vm652 = vcmp.gt.f32.partialorder %v595, 0.0
      %vm653 = vcmp.gt.f32.partialorder %v423, 0.0
      %vm654 = vcmp.gt.f32.partialorder %v481, 0.0
      %vm655 = vcmp.gt.f32.partialorder %v539, 0.0
      %vm656 = vcmp.gt.f32.partialorder %v597, 0.0
      %vm657 = vcmp.gt.f32.partialorder %v426, 0.0
      %vm658 = vcmp.gt.f32.partialorder %v484, 0.0
      %vm659 = vcmp.gt.f32.partialorder %v542, 0.0
      %vm660 = vcmp.gt.f32.partialorder %v600, 0.0
      %vm661 = vcmp.gt.f32.partialorder %v428, 0.0
      %vm662 = vcmp.gt.f32.partialorder %v486, 0.0
      %vm663 = vcmp.gt.f32.partialorder %v544, 0.0
      %vm664 = vcmp.gt.f32.partialorder %v602, 0.0
      %vm665 = vcmp.gt.f32.partialorder %v431, 0.0
      %vm666 = vcmp.gt.f32.partialorder %v489, 0.0
      %vm667 = vcmp.gt.f32.partialorder %v547, 0.0
      %vm668 = vcmp.gt.f32.partialorder %v605, 0.0
      %vm669 = vcmp.gt.f32.partialorder %v433, 0.0
      %vm670 = vcmp.gt.f32.partialorder %v491, 0.0
      %vm671 = vcmp.gt.f32.partialorder %v549, 0.0
      %vm672 = vcmp.gt.f32.partialorder %v607, 0.0
      %vm673 = vcmp.gt.f32.partialorder %v436, 0.0
      %vm674 = vcmp.gt.f32.partialorder %v494, 0.0
      %vm675 = vcmp.gt.f32.partialorder %v552, 0.0
      %vm676 = vcmp.gt.f32.partialorder %v610, 0.0
      %vm677 = vcmp.gt.f32.partialorder %v438, 0.0
      %vm678 = vcmp.gt.f32.partialorder %v496, 0.0
      %vm679 = vcmp.gt.f32.partialorder %v554, 0.0
      %vm680 = vcmp.gt.f32.partialorder %v612, 0.0
      %vm681 = vcmp.gt.f32.partialorder %v441, 0.0
      %vm682 = vcmp.gt.f32.partialorder %v499, 0.0
      %vm683 = vcmp.gt.f32.partialorder %v557, 0.0
      %vm684 = vcmp.gt.f32.partialorder %v615, 0.0
      %vm685 = vcmp.gt.f32.partialorder %v443, 0.0
      %vm686 = vcmp.gt.f32.partialorder %v501, 0.0
      %vm687 = vcmp.gt.f32.partialorder %v559, 0.0
      %vm688 = vcmp.gt.f32.partialorder %v617, 0.0
      %vm689 = vcmp.gt.f32.partialorder %v446, 0.0
      %vm690 = vcmp.gt.f32.partialorder %v504, 0.0
      %vm691 = vcmp.gt.f32.partialorder %v562, 0.0
      %vm692 = vcmp.gt.f32.partialorder %v620, 0.0
      %vm693 = vcmp.gt.f32.partialorder %v448, 0.0
      %vm694 = vcmp.gt.f32.partialorder %v506, 0.0
      %vm695 = vcmp.gt.f32.partialorder %v564, 0.0
      %vm696 = vcmp.gt.f32.partialorder %v622, 0.0
      %vm697 = vcmp.gt.f32.partialorder %v451, 0.0
      %vm698 = vcmp.gt.f32.partialorder %v509, 0.0
      %vm699 = vcmp.gt.f32.partialorder %v567, 0.0
      %vm700 = vcmp.gt.f32.partialorder %v625, 0.0
      %vm701 = vcmp.gt.f32.partialorder %v453, 0.0
      %vm702 = vcmp.gt.f32.partialorder %v511, 0.0
      %vm703 = vcmp.gt.f32.partialorder %v569, 0.0
      %vm704 = vcmp.gt.f32.partialorder %v627, 0.0
      %vm705 = vcmp.gt.f32.partialorder %v456, 0.0
      %vm706 = vcmp.gt.f32.partialorder %v514, 0.0
      %vm707 = vcmp.gt.f32.partialorder %v572, 0.0
      %vm708 = vcmp.gt.f32.partialorder %v630, 0.0
      %v709 = vmul.f32 %v411, 0.2
      %v710 = vmul.f32 %v469, 0.2
      %v711 = vmul.f32 %v527, 0.2
      %v712 = vmul.f32 %v585, 0.2
      %v713 = vmul.f32 %v413, 0.2
      %v714 = vmul.f32 %v471, 0.2
      %v715 = vmul.f32 %v529, 0.2
      %v716 = vmul.f32 %v587, 0.2
      %v717 = vmul.f32 %v416, 0.2
      %v718 = vmul.f32 %v474, 0.2
      %v719 = vmul.f32 %v532, 0.2
      %v720 = vmul.f32 %v590, 0.2
      %v721 = vmul.f32 %v418, 0.2
      %v722 = vmul.f32 %v476, 0.2
      %v723 = vmul.f32 %v534, 0.2
      %v724 = vmul.f32 %v592, 0.2
      %v725 = vmul.f32 %v421, 0.2
      %v726 = vmul.f32 %v479, 0.2
      %v727 = vmul.f32 %v537, 0.2
      %v728 = vmul.f32 %v595, 0.2
      %v729 = vmul.f32 %v423, 0.2
      %v730 = vmul.f32 %v481, 0.2
      %v731 = vmul.f32 %v539, 0.2
      %v732 = vmul.f32 %v597, 0.2
      %v733 = vmul.f32 %v426, 0.2
      %v734 = vmul.f32 %v484, 0.2
      %v735 = vmul.f32 %v542, 0.2
      %v736 = vmul.f32 %v600, 0.2
      %v737 = vmul.f32 %v428, 0.2
      %v738 = vmul.f32 %v486, 0.2
      %v739 = vmul.f32 %v544, 0.2
      %v740 = vmul.f32 %v602, 0.2
      %v741 = vmul.f32 %v431, 0.2
      %v742 = vmul.f32 %v489, 0.2
      %v743 = vmul.f32 %v547, 0.2
      %v744 = vmul.f32 %v605, 0.2
      %v745 = vmul.f32 %v433, 0.2
      %v746 = vmul.f32 %v491, 0.2
      %v747 = vmul.f32 %v549, 0.2
      %v748 = vmul.f32 %v607, 0.2
      %v749 = vmul.f32 %v436, 0.2
      %v750 = vmul.f32 %v494, 0.2
      %v751 = vmul.f32 %v552, 0.2
      %v752 = vmul.f32 %v610, 0.2
      %v753 = vmul.f32 %v438, 0.2
      %v754 = vmul.f32 %v496, 0.2
      %v755 = vmul.f32 %v554, 0.2
      %v756 = vmul.f32 %v612, 0.2
      %v757 = vmul.f32 %v441, 0.2
      %v758 = vmul.f32 %v499, 0.2
      %v759 = vmul.f32 %v557, 0.2
      %v760 = vmul.f32 %v615, 0.2
      %v761 = vmul.f32 %v443, 0.2
      %v762 = vmul.f32 %v501, 0.2
      %v763 = vmul.f32 %v559, 0.2
      %v764 = vmul.f32 %v617, 0.2
      %v765 = vmul.f32 %v446, 0.2
      %v766 = vmul.f32 %v504, 0.2
      %v767 = vmul.f32 %v562, 0.2
      %v768 = vmul.f32 %v620, 0.2
      %v769 = vmul.f32 %v448, 0.2
      %v770 = vmul.f32 %v506, 0.2
      %v771 = vmul.f32 %v564, 0.2
      %v772 = vmul.f32 %v622, 0.2
      %v773 = vmul.f32 %v451, 0.2
      %v774 = vmul.f32 %v509, 0.2
      %v775 = vmul.f32 %v567, 0.2
      %v776 = vmul.f32 %v625, 0.2
      %v777 = vmul.f32 %v453, 0.2
      %v778 = vmul.f32 %v511, 0.2
      %v779 = vmul.f32 %v569, 0.2
      %v780 = vmul.f32 %v627, 0.2
      %v781 = vmul.f32 %v456, 0.2
      %v782 = vmul.f32 %v514, 0.2
      %v783 = vmul.f32 %v572, 0.2
      %v784 = vmul.f32 %v630, 0.2
      %v785 = vsel %vm633, %v411, %v709
      %v786 = vsel %vm634, %v469, %v710
      %v787 = vsel %vm635, %v527, %v711
      %v788 = vsel %vm636, %v585, %v712
      %v789 = vsel %vm637, %v413, %v713
      %v790 = vsel %vm638, %v471, %v714
      %v791 = vsel %vm639, %v529, %v715
      %v792 = vsel %vm640, %v587, %v716
      %v793 = vsel %vm641, %v416, %v717
      %v794 = vsel %vm642, %v474, %v718
      %v795 = vsel %vm643, %v532, %v719
      %v796 = vsel %vm644, %v590, %v720
      %v797 = vsel %vm645, %v418, %v721
      %v798 = vsel %vm646, %v476, %v722
      %v799 = vsel %vm647, %v534, %v723
      %v800 = vsel %vm648, %v592, %v724
      %v801 = vsel %vm649, %v421, %v725
      %v802 = vsel %vm650, %v479, %v726
      %v803 = vsel %vm651, %v537, %v727
      %v804 = vsel %vm652, %v595, %v728
      %v805 = vsel %vm653, %v423, %v729
      %v806 = vsel %vm654, %v481, %v730
      %v807 = vsel %vm655, %v539, %v731
      %v808 = vsel %vm656, %v597, %v732
      %v809 = vsel %vm657, %v426, %v733
      %v810 = vsel %vm658, %v484, %v734
      %v811 = vsel %vm659, %v542, %v735
      %v812 = vsel %vm660, %v600, %v736
      %v813 = vsel %vm661, %v428, %v737
      %v814 = vsel %vm662, %v486, %v738
      %v815 = vsel %vm663, %v544, %v739
      %v816 = vsel %vm664, %v602, %v740
      %v817 = vsel %vm665, %v431, %v741
      %v818 = vsel %vm666, %v489, %v742
      %v819 = vsel %vm667, %v547, %v743
      %v820 = vsel %vm668, %v605, %v744
      %v821 = vsel %vm669, %v433, %v745
      %v822 = vsel %vm670, %v491, %v746
      %v823 = vsel %vm671, %v549, %v747
      %v824 = vsel %vm672, %v607, %v748
      %v825 = vsel %vm673, %v436, %v749
      %v826 = vsel %vm674, %v494, %v750
      %v827 = vsel %vm675, %v552, %v751
      %v828 = vsel %vm676, %v610, %v752
      %v829 = vsel %vm677, %v438, %v753
      %v830 = vsel %vm678, %v496, %v754
      %v831 = vsel %vm679, %v554, %v755
      %v832 = vsel %vm680, %v612, %v756
      %v833 = vsel %vm681, %v441, %v757
      %v834 = vsel %vm682, %v499, %v758
      %v835 = vsel %vm683, %v557, %v759
      %v836 = vsel %vm684, %v615, %v760
      %v837 = vsel %vm685, %v443, %v761
      %v838 = vsel %vm686, %v501, %v762
      %v839 = vsel %vm687, %v559, %v763
      %v840 = vsel %vm688, %v617, %v764
      %v841 = vsel %vm689, %v446, %v765
      %v842 = vsel %vm690, %v504, %v766
      %v843 = vsel %vm691, %v562, %v767
      %v844 = vsel %vm692, %v620, %v768
      %v845 = vsel %vm693, %v448, %v769
      %v846 = vsel %vm694, %v506, %v770
      %v847 = vsel %vm695, %v564, %v771
      %v848 = vsel %vm696, %v622, %v772
      %v849 = vsel %vm697, %v451, %v773
      %v850 = vsel %vm698, %v509, %v774
      %v851 = vsel %vm699, %v567, %v775
      %v852 = vsel %vm700, %v625, %v776
      %v853 = vsel %vm701, %v453, %v777
      %v854 = vsel %vm702, %v511, %v778
      %v855 = vsel %vm703, %v569, %v779
      %v856 = vsel %vm704, %v627, %v780
      %v857 = vsel %vm705, %v456, %v781
      %v858 = vsel %vm706, %v514, %v782
      %v859 = vsel %vm707, %v572, %v783
      %v860 = vsel %vm708, %v630, %v784
      %v861 = vpack.c.bf16 %v789, %v785
      %v862 = vpack.c.bf16 %v790, %v786
      %v863 = vpack.c.bf16 %v791, %v787
      %v864 = vpack.c.bf16 %v792, %v788
      %v865 = vpack.c.bf16 %v797, %v793
      %v866 = vpack.c.bf16 %v798, %v794
      %v867 = vpack.c.bf16 %v799, %v795
      %v868 = vpack.c.bf16 %v800, %v796
      %v869 = vpack.c.bf16 %v805, %v801
      %v870 = vpack.c.bf16 %v806, %v802
      %v871 = vpack.c.bf16 %v807, %v803
      %v872 = vpack.c.bf16 %v808, %v804
      %v873 = vpack.c.bf16 %v813, %v809
      %v874 = vpack.c.bf16 %v814, %v810
      %v875 = vpack.c.bf16 %v815, %v811
      %v876 = vpack.c.bf16 %v816, %v812
      %v877 = vpack.c.bf16 %v821, %v817
      %v878 = vpack.c.bf16 %v822, %v818
      %v879 = vpack.c.bf16 %v823, %v819
      %v880 = vpack.c.bf16 %v824, %v820
      %v881 = vpack.c.bf16 %v829, %v825
      %v882 = vpack.c.bf16 %v830, %v826
      %v883 = vpack.c.bf16 %v831, %v827
      %v884 = vpack.c.bf16 %v832, %v828
      %v885 = vpack.c.bf16 %v837, %v833
      %v886 = vpack.c.bf16 %v838, %v834
      %v887 = vpack.c.bf16 %v839, %v835
      %v888 = vpack.c.bf16 %v840, %v836
      %v889 = vpack.c.bf16 %v845, %v841
      %v890 = vpack.c.bf16 %v846, %v842
      %v891 = vpack.c.bf16 %v847, %v843
      %v892 = vpack.c.bf16 %v848, %v844
      %v893 = vpack.c.bf16 %v853, %v849
      %v894 = vpack.c.bf16 %v854, %v850
      %v895 = vpack.c.bf16 %v855, %v851
      %v896 = vpack.c.bf16 %v856, %v852
      %v897 = vpack.c.bf16 %v857, %v857
      %v898 = vpack.c.bf16 %v858, %v858
      %v899 = vpack.c.bf16 %v859, %v859
      %v900 = vpack.c.bf16 %v860, %v860
      %v901 = vld [vmem:[%s3] sm:$0xff]
      %v902 = vld [vmem:[%s3 + $0x8] sm:$0xff]
      %v903 = vld [vmem:[%s3 + $0x10] sm:$0xff]
      %v904 = vld [vmem:[%s3 + $0x18] sm:$0xff]
      %v905 = vld [vmem:[%s3 + $0x20] sm:$0xff]
      %v906 = vld [vmem:[%s3 + $0x28] sm:$0xff]
      %v907 = vld [vmem:[%s3 + $0x30] sm:$0xff]
      %v908 = vld [vmem:[%s3 + $0x38] sm:$0xff]
      %v909 = vld [vmem:[%s3 + $0x40] sm:$0xff]
      %v910 = vld [vmem:[%s3 + $0x48] sm:$0xff]
      %v911 = vld [vmem:[%s3 + $0x50] sm:$0xff]
      %v912 = vld [vmem:[%s3 + $0x58] sm:$0xff]
      %v913 = vld [vmem:[%s3 + $0x60] sm:$0xff]
      %v914 = vld [vmem:[%s3 + $0x68] sm:$0xff]
      %v915 = vld [vmem:[%s3 + $0x70] sm:$0xff]
      %v916 = vld [vmem:[%s3 + $0x78] sm:$0xff]
      %v917 = vld [vmem:[%s3 + $0x80] sm:$0xff]
      %v918 = vld [vmem:[%s3 + $0x88] sm:$0xff]
      %v919 = vld [vmem:[%s3 + $0x90] sm:$0xff]
      %v920 = vld [vmem:[%s3 + $0x98] sm:$0xff]
      %v921 = vld [vmem:[%s3 + $0xa0] sm:$0xff]
      %v922 = vld [vmem:[%s3 + $0xa8] sm:$0xff]
      %v923 = vld [vmem:[%s3 + $0xb0] sm:$0xff]
      %v924 = vld [vmem:[%s3 + $0xb8] sm:$0xff]
      %v925 = vld [vmem:[%s3 + $0xc0] sm:$0xff]
      %v926 = vld [vmem:[%s3 + $0xc8] sm:$0xff]
      %v927 = vld [vmem:[%s3 + $0xd0] sm:$0xff]
      %v928 = vld [vmem:[%s3 + $0xd8] sm:$0xff]
      %v929 = vld [vmem:[%s3 + $0xe0] sm:$0xff]
      %v930 = vld [vmem:[%s3 + $0xe8] sm:$0xff]
      %v931 = vld [vmem:[%s3 + $0xf0] sm:$0xff]
      %v932 = vld [vmem:[%s3 + $0xf8] sm:$0xff]
      %v933 = vld [vmem:[%s3 + $0x100] sm:$0xff]
      %v934 = vld [vmem:[%s3 + $0x108] sm:$0xff]
      %v935 = vld [vmem:[%s3 + $0x110] sm:$0xff]
      %v936 = vld [vmem:[%s3 + $0x118] sm:$0xff]
      %v937 = vld [vmem:[%s3 + $0x120] sm:$0xff]
      %v938 = vld [vmem:[%s3 + $0x128] sm:$0xff]
      %v939 = vld [vmem:[%s3 + $0x130] sm:$0xff]
      %v940 = vld [vmem:[%s3 + $0x138] sm:$0xff]
      %v941 = vld [vmem:[%s3 + $0x140] sm:$0xff]
      %v942 = vld [vmem:[%s3 + $0x148] sm:$0xff]
      %v943 = vld [vmem:[%s3 + $0x150] sm:$0xff]
      %v944 = vld [vmem:[%s3 + $0x158] sm:$0xff]
      %v945 = vld [vmem:[%s3 + $0x160] sm:$0xff]
      %v946 = vld [vmem:[%s3 + $0x168] sm:$0xff]
      %v947 = vld [vmem:[%s3 + $0x170] sm:$0xff]
      %v948 = vld [vmem:[%s3 + $0x178] sm:$0xff]
      %v949 = vld [vmem:[%s3 + $0x180] sm:$0xff]
      %v950 = vld [vmem:[%s3 + $0x188] sm:$0xff]
      %v951 = vld [vmem:[%s3 + $0x190] sm:$0xff]
      %v952 = vld [vmem:[%s3 + $0x198] sm:$0xff]
      %v953 = vld [vmem:[%s3 + $0x1a0] sm:$0xff]
      %v954 = vld [vmem:[%s3 + $0x1a8] sm:$0xff]
      %v955 = vld [vmem:[%s3 + $0x1b0] sm:$0xff]
      %v956 = vld [vmem:[%s3 + $0x1b8] sm:$0xff]
      %v957 = vld [vmem:[%s3 + $0x1c0] sm:$0xff]
      %v958 = vld [vmem:[%s3 + $0x1c8] sm:$0xff]
      %v959 = vld [vmem:[%s3 + $0x1d0] sm:$0xff]
      %v960 = vld [vmem:[%s3 + $0x1d8] sm:$0xff]
      %v961 = vld [vmem:[%s3 + $0x1e0] sm:$0xff]
      %v962 = vld [vmem:[%s3 + $0x1e8] sm:$0xff]
      %v963 = vld [vmem:[%s3 + $0x1f0] sm:$0xff]
      %v964 = vld [vmem:[%s3 + $0x1f8] sm:$0xff]
      %v965 = vld [vmem:[%s4] sm:$0x3]
      %v967 = vperm.slane %v965, 0
      %v968 = vperm.slane %v965, 1
      %v1035 = vunpack.c.l.b16 %v901
      %v1036 = vunpack.c.h.b16 %v901
      %v1037 = vunpack.c.l.b16 %v902
      %v1038 = vunpack.c.h.b16 %v902
      %v1039 = vunpack.c.l.b16 %v903
      %v1040 = vunpack.c.h.b16 %v903
      %v1041 = vunpack.c.l.b16 %v904
      %v1042 = vunpack.c.h.b16 %v904
      %v1043 = vunpack.c.l.b16 %v905
      %v1044 = vunpack.c.h.b16 %v905
      %v1045 = vunpack.c.l.b16 %v906
      %v1046 = vunpack.c.h.b16 %v906
      %v1047 = vunpack.c.l.b16 %v907
      %v1048 = vunpack.c.h.b16 %v907
      %v1049 = vunpack.c.l.b16 %v908
      %v1050 = vunpack.c.h.b16 %v908
      %v1051 = vunpack.c.l.b16 %v909
      %v1052 = vunpack.c.h.b16 %v909
      %v1053 = vunpack.c.l.b16 %v910
      %v1054 = vunpack.c.h.b16 %v910
      %v1055 = vunpack.c.l.b16 %v911
      %v1056 = vunpack.c.h.b16 %v911
      %v1057 = vunpack.c.l.b16 %v912
      %v1058 = vunpack.c.h.b16 %v912
      %v1059 = vunpack.c.l.b16 %v913
      %v1060 = vunpack.c.h.b16 %v913
      %v1061 = vunpack.c.l.b16 %v914
      %v1062 = vunpack.c.h.b16 %v914
      %v1063 = vunpack.c.l.b16 %v915
      %v1064 = vunpack.c.h.b16 %v915
      %v1065 = vunpack.c.l.b16 %v916
      %v1066 = vunpack.c.h.b16 %v916
      %v1067 = vunpack.c.l.b16 %v917
      %v1068 = vunpack.c.h.b16 %v917
      %v1069 = vunpack.c.l.b16 %v918
      %v1070 = vunpack.c.h.b16 %v918
      %v1071 = vunpack.c.l.b16 %v919
      %v1072 = vunpack.c.h.b16 %v919
      %v1073 = vunpack.c.l.b16 %v920
      %v1074 = vunpack.c.h.b16 %v920
      %v1075 = vunpack.c.l.b16 %v921
      %v1076 = vunpack.c.h.b16 %v921
      %v1077 = vunpack.c.l.b16 %v922
      %v1078 = vunpack.c.h.b16 %v922
      %v1079 = vunpack.c.l.b16 %v923
      %v1080 = vunpack.c.h.b16 %v923
      %v1081 = vunpack.c.l.b16 %v924
      %v1082 = vunpack.c.h.b16 %v924
      %v1083 = vunpack.c.l.b16 %v925
      %v1084 = vunpack.c.h.b16 %v925
      %v1085 = vunpack.c.l.b16 %v926
      %v1086 = vunpack.c.h.b16 %v926
      %v1087 = vunpack.c.l.b16 %v927
      %v1088 = vunpack.c.h.b16 %v927
      %v1089 = vunpack.c.l.b16 %v928
      %v1090 = vunpack.c.h.b16 %v928
      %v1091 = vunpack.c.l.b16 %v929
      %v1092 = vunpack.c.h.b16 %v929
      %v1093 = vunpack.c.l.b16 %v930
      %v1094 = vunpack.c.h.b16 %v930
      %v1095 = vunpack.c.l.b16 %v931
      %v1096 = vunpack.c.h.b16 %v931
      %v1097 = vunpack.c.l.b16 %v932
      %v1098 = vunpack.c.h.b16 %v932
      %v1099 = vunpack.c.l.b16 %v933
      %v1100 = vunpack.c.h.b16 %v933
      %v1101 = vunpack.c.l.b16 %v934
      %v1102 = vunpack.c.h.b16 %v934
      %v1103 = vunpack.c.l.b16 %v935
      %v1104 = vunpack.c.h.b16 %v935
      %v1105 = vunpack.c.l.b16 %v936
      %v1106 = vunpack.c.h.b16 %v936
      %v1107 = vunpack.c.l.b16 %v937
      %v1108 = vunpack.c.h.b16 %v937
      %v1109 = vunpack.c.l.b16 %v938
      %v1110 = vunpack.c.h.b16 %v938
      %v1111 = vunpack.c.l.b16 %v939
      %v1112 = vunpack.c.h.b16 %v939
      %v1113 = vunpack.c.l.b16 %v940
      %v1114 = vunpack.c.h.b16 %v940
      %v1115 = vunpack.c.l.b16 %v941
      %v1116 = vunpack.c.h.b16 %v941
      %v1117 = vunpack.c.l.b16 %v942
      %v1118 = vunpack.c.h.b16 %v942
      %v1119 = vunpack.c.l.b16 %v943
      %v1120 = vunpack.c.h.b16 %v943
      %v1121 = vunpack.c.l.b16 %v944
      %v1122 = vunpack.c.h.b16 %v944
      %v1123 = vunpack.c.l.b16 %v945
      %v1124 = vunpack.c.h.b16 %v945
      %v1125 = vunpack.c.l.b16 %v946
      %v1126 = vunpack.c.h.b16 %v946
      %v1127 = vunpack.c.l.b16 %v947
      %v1128 = vunpack.c.h.b16 %v947
      %v1129 = vunpack.c.l.b16 %v948
      %v1130 = vunpack.c.h.b16 %v948
      %v1131 = vunpack.c.l.b16 %v949
      %v1132 = vunpack.c.h.b16 %v949
      %v1133 = vunpack.c.l.b16 %v950
      %v1134 = vunpack.c.h.b16 %v950
      %v1135 = vunpack.c.l.b16 %v951
      %v1136 = vunpack.c.h.b16 %v951
      %v1137 = vunpack.c.l.b16 %v952
      %v1138 = vunpack.c.h.b16 %v952
      %v1139 = vunpack.c.l.b16 %v953
      %v1140 = vunpack.c.h.b16 %v953
      %v1141 = vunpack.c.l.b16 %v954
      %v1142 = vunpack.c.h.b16 %v954
      %v1143 = vunpack.c.l.b16 %v955
      %v1144 = vunpack.c.h.b16 %v955
      %v1145 = vunpack.c.l.b16 %v956
      %v1146 = vunpack.c.h.b16 %v956
      %v1147 = vunpack.c.l.b16 %v957
      %v1148 = vunpack.c.h.b16 %v957
      %v1149 = vunpack.c.l.b16 %v958
      %v1150 = vunpack.c.h.b16 %v958
      %v1151 = vunpack.c.l.b16 %v959
      %v1152 = vunpack.c.h.b16 %v959
      %v1153 = vunpack.c.l.b16 %v960
      %v1154 = vunpack.c.h.b16 %v960
      %v1155 = vunpack.c.l.b16 %v961
      %v1156 = vunpack.c.h.b16 %v961
      %v1157 = vunpack.c.l.b16 %v962
      %v1158 = vunpack.c.h.b16 %v962
      %v1159 = vunpack.c.l.b16 %v963
      %v1160 = vunpack.c.h.b16 %v963
      %v1161 = vunpack.c.l.b16 %v964
      %v1162 = vunpack.c.h.b16 %v964
      %v1163 = vpack.c.b16 %v1037, %v1035
      %v1164 = vpack.c.b16 %v1038, %v1036
      %v1165 = vpack.c.b16 %v1041, %v1039
      %v1166 = vpack.c.b16 %v1042, %v1040
      %v1167 = vpack.c.b16 %v1045, %v1043
      %v1168 = vpack.c.b16 %v1046, %v1044
      %v1169 = vpack.c.b16 %v1049, %v1047
      %v1170 = vpack.c.b16 %v1050, %v1048
      %v1171 = vpack.c.b16 %v1053, %v1051
      %v1172 = vpack.c.b16 %v1054, %v1052
      %v1173 = vpack.c.b16 %v1057, %v1055
      %v1174 = vpack.c.b16 %v1058, %v1056
      %v1175 = vpack.c.b16 %v1061, %v1059
      %v1176 = vpack.c.b16 %v1062, %v1060
      %v1177 = vpack.c.b16 %v1065, %v1063
      %v1178 = vpack.c.b16 %v1066, %v1064
      %v1179 = vpack.c.b16 %v1069, %v1067
      %v1180 = vpack.c.b16 %v1070, %v1068
      %v1181 = vpack.c.b16 %v1073, %v1071
      %v1182 = vpack.c.b16 %v1074, %v1072
      %v1183 = vpack.c.b16 %v1077, %v1075
      %v1184 = vpack.c.b16 %v1078, %v1076
      %v1185 = vpack.c.b16 %v1081, %v1079
      %v1186 = vpack.c.b16 %v1082, %v1080
      %v1187 = vpack.c.b16 %v1085, %v1083
      %v1188 = vpack.c.b16 %v1086, %v1084
      %v1189 = vpack.c.b16 %v1089, %v1087
      %v1190 = vpack.c.b16 %v1090, %v1088
      %v1191 = vpack.c.b16 %v1093, %v1091
      %v1192 = vpack.c.b16 %v1094, %v1092
      %v1193 = vpack.c.b16 %v1097, %v1095
      %v1194 = vpack.c.b16 %v1098, %v1096
      %v1195 = vpack.c.b16 %v1101, %v1099
      %v1196 = vpack.c.b16 %v1102, %v1100
      %v1197 = vpack.c.b16 %v1105, %v1103
      %v1198 = vpack.c.b16 %v1106, %v1104
      %v1199 = vpack.c.b16 %v1109, %v1107
      %v1200 = vpack.c.b16 %v1110, %v1108
      %v1201 = vpack.c.b16 %v1113, %v1111
      %v1202 = vpack.c.b16 %v1114, %v1112
      %v1203 = vpack.c.b16 %v1117, %v1115
      %v1204 = vpack.c.b16 %v1118, %v1116
      %v1205 = vpack.c.b16 %v1121, %v1119
      %v1206 = vpack.c.b16 %v1122, %v1120
      %v1207 = vpack.c.b16 %v1125, %v1123
      %v1208 = vpack.c.b16 %v1126, %v1124
      %v1209 = vpack.c.b16 %v1129, %v1127
      %v1210 = vpack.c.b16 %v1130, %v1128
      %v1211 = vpack.c.b16 %v1133, %v1131
      %v1212 = vpack.c.b16 %v1134, %v1132
      %v1213 = vpack.c.b16 %v1137, %v1135
      %v1214 = vpack.c.b16 %v1138, %v1136
      %v1215 = vpack.c.b16 %v1141, %v1139
      %v1216 = vpack.c.b16 %v1142, %v1140
      %v1217 = vpack.c.b16 %v1145, %v1143
      %v1218 = vpack.c.b16 %v1146, %v1144
      %v1219 = vpack.c.b16 %v1149, %v1147
      %v1220 = vpack.c.b16 %v1150, %v1148
      %v1221 = vpack.c.b16 %v1153, %v1151
      %v1222 = vpack.c.b16 %v1154, %v1152
      %v1223 = vpack.c.b16 %v1157, %v1155
      %v1224 = vpack.c.b16 %v1158, %v1156
      %v1225 = vpack.c.b16 %v1161, %v1159
      %v1226 = vpack.c.b16 %v1162, %v1160
      %1291 = vmatpush.bf16.msra.mxu0 %v1177
      %1292 = vmatpush.bf16.msra.mxu0 %v1175
      %1293 = vmatpush.bf16.msra.mxu0 %v1173
      %1294 = vmatpush.bf16.msra.mxu0 %v1171
      %1295 = vmatpush.bf16.msra.mxu0 %v1169
      %1296 = vmatpush.bf16.msra.mxu0 %v1167
      %1297 = vmatpush.bf16.msra.mxu0 %v1165
      %1298 = vmatpush.bf16.msra.mxu0 %v1163
      %1299 = vmatmul.bf16.gmra.mxu0 %v861
      %v1300 = vpop.f32.mrf.mxu0
      %v1301 = vadd.f32 %v967, %v1300
      %v1302 = vpop.f32.mrf.mxu0
      %v1303 = vadd.f32 %v967, %v1302
      %1304 = vmatmul.bf16.gmra.mxu0 %v865
      %v1305 = vpop.f32.mrf.mxu0
      %v1306 = vadd.f32 %v967, %v1305
      %v1307 = vpop.f32.mrf.mxu0
      %v1308 = vadd.f32 %v967, %v1307
      %1309 = vmatmul.bf16.gmra.mxu0 %v869
      %v1310 = vpop.f32.mrf.mxu0
      %v1311 = vadd.f32 %v967, %v1310
      %v1312 = vpop.f32.mrf.mxu0
      %v1313 = vadd.f32 %v967, %v1312
      %1314 = vmatmul.bf16.gmra.mxu0 %v873
      %v1315 = vpop.f32.mrf.mxu0
      %v1316 = vadd.f32 %v967, %v1315
      %v1317 = vpop.f32.mrf.mxu0
      %v1318 = vadd.f32 %v967, %v1317
      %1319 = vmatmul.bf16.gmra.mxu0 %v877
      %v1320 = vpop.f32.mrf.mxu0
      %v1321 = vadd.f32 %v967, %v1320
      %v1322 = vpop.f32.mrf.mxu0
      %v1323 = vadd.f32 %v967, %v1322
      %1324 = vmatmul.bf16.gmra.mxu0 %v881
      %v1325 = vpop.f32.mrf.mxu0
      %v1326 = vadd.f32 %v967, %v1325
      %v1327 = vpop.f32.mrf.mxu0
      %v1328 = vadd.f32 %v967, %v1327
      %1329 = vmatmul.bf16.gmra.mxu0 %v885
      %v1330 = vpop.f32.mrf.mxu0
      %v1331 = vadd.f32 %v967, %v1330
      %v1332 = vpop.f32.mrf.mxu0
      %v1333 = vadd.f32 %v967, %v1332
      %1334 = vmatmul.bf16.gmra.mxu0 %v889
      %v1335 = vpop.f32.mrf.mxu0
      %v1336 = vadd.f32 %v967, %v1335
      %v1337 = vpop.f32.mrf.mxu0
      %v1338 = vadd.f32 %v967, %v1337
      %1339 = vmatmul.bf16.gmra.mxu0 %v893
      %v1340 = vpop.f32.mrf.mxu0
      %v1341 = vadd.f32 %v967, %v1340
      %v1342 = vpop.f32.mrf.mxu0
      %v1343 = vadd.f32 %v967, %v1342
      %1344 = vmatmul.bf16.gmra.mxu0 %v897
      %v1345 = vpop.f32.mrf.mxu0
      %v1346 = vadd.f32 %v967, %v1345
      %v1347 = vpop.f32.mrf.mxu0
      %1348 = vdwg.mxu0
      %1349 = vmatpush.bf16.msra.mxu0 %v1193
      %1350 = vmatpush.bf16.msra.mxu0 %v1191
      %1351 = vmatpush.bf16.msra.mxu0 %v1189
      %1352 = vmatpush.bf16.msra.mxu0 %v1187
      %1353 = vmatpush.bf16.msra.mxu0 %v1185
      %1354 = vmatpush.bf16.msra.mxu0 %v1183
      %1355 = vmatpush.bf16.msra.mxu0 %v1181
      %1356 = vmatpush.bf16.msra.mxu0 %v1179
      %1357 = vmatmul.bf16.gmra.mxu0 %v862
      %v1358 = vpop.f32.mrf.mxu0
      %v1359 = vadd.f32 %v1301, %v1358
      %v1360 = vpop.f32.mrf.mxu0
      %v1361 = vadd.f32 %v1303, %v1360
      %1362 = vmatmul.bf16.gmra.mxu0 %v866
      %v1363 = vpop.f32.mrf.mxu0
      %v1364 = vadd.f32 %v1306, %v1363
      %v1365 = vpop.f32.mrf.mxu0
      %v1366 = vadd.f32 %v1308, %v1365
      %1367 = vmatmul.bf16.gmra.mxu0 %v870
      %v1368 = vpop.f32.mrf.mxu0
      %v1369 = vadd.f32 %v1311, %v1368
      %v1370 = vpop.f32.mrf.mxu0
      %v1371 = vadd.f32 %v1313, %v1370
      %1372 = vmatmul.bf16.gmra.mxu0 %v874
      %v1373 = vpop.f32.mrf.mxu0
      %v1374 = vadd.f32 %v1316, %v1373
      %v1375 = vpop.f32.mrf.mxu0
      %v1376 = vadd.f32 %v1318, %v1375
      %1377 = vmatmul.bf16.gmra.mxu0 %v878
      %v1378 = vpop.f32.mrf.mxu0
      %v1379 = vadd.f32 %v1321, %v1378
      %v1380 = vpop.f32.mrf.mxu0
      %v1381 = vadd.f32 %v1323, %v1380
      %1382 = vmatmul.bf16.gmra.mxu0 %v882
      %v1383 = vpop.f32.mrf.mxu0
      %v1384 = vadd.f32 %v1326, %v1383
      %v1385 = vpop.f32.mrf.mxu0
      %v1386 = vadd.f32 %v1328, %v1385
      %1387 = vmatmul.bf16.gmra.mxu0 %v886
      %v1388 = vpop.f32.mrf.mxu0
      %v1389 = vadd.f32 %v1331, %v1388
      %v1390 = vpop.f32.mrf.mxu0
      %v1391 = vadd.f32 %v1333, %v1390
      %1392 = vmatmul.bf16.gmra.mxu0 %v890
      %v1393 = vpop.f32.mrf.mxu0
      %v1394 = vadd.f32 %v1336, %v1393
      %v1395 = vpop.f32.mrf.mxu0
      %v1396 = vadd.f32 %v1338, %v1395
      %1397 = vmatmul.bf16.gmra.mxu0 %v894
      %v1398 = vpop.f32.mrf.mxu0
      %v1399 = vadd.f32 %v1341, %v1398
      %v1400 = vpop.f32.mrf.mxu0
      %v1401 = vadd.f32 %v1343, %v1400
      %1402 = vmatmul.bf16.gmra.mxu0 %v898
      %v1403 = vpop.f32.mrf.mxu0
      %v1404 = vadd.f32 %v1346, %v1403
      %v1405 = vpop.f32.mrf.mxu0
      %1406 = vdwg.mxu0
      %1407 = vmatpush.bf16.msra.mxu0 %v1209
      %1408 = vmatpush.bf16.msra.mxu0 %v1207
      %1409 = vmatpush.bf16.msra.mxu0 %v1205
      %1410 = vmatpush.bf16.msra.mxu0 %v1203
      %1411 = vmatpush.bf16.msra.mxu0 %v1201
      %1412 = vmatpush.bf16.msra.mxu0 %v1199
      %1413 = vmatpush.bf16.msra.mxu0 %v1197
      %1414 = vmatpush.bf16.msra.mxu0 %v1195
      %1415 = vmatmul.bf16.gmra.mxu0 %v863
      %v1416 = vpop.f32.mrf.mxu0
      %v1417 = vadd.f32 %v1359, %v1416
      %v1418 = vpop.f32.mrf.mxu0
      %v1419 = vadd.f32 %v1361, %v1418
      %1420 = vmatmul.bf16.gmra.mxu0 %v867
      %v1421 = vpop.f32.mrf.mxu0
      %v1422 = vadd.f32 %v1364, %v1421
      %v1423 = vpop.f32.mrf.mxu0
      %v1424 = vadd.f32 %v1366, %v1423
      %1425 = vmatmul.bf16.gmra.mxu0 %v871
      %v1426 = vpop.f32.mrf.mxu0
      %v1427 = vadd.f32 %v1369, %v1426
      %v1428 = vpop.f32.mrf.mxu0
      %v1429 = vadd.f32 %v1371, %v1428
      %1430 = vmatmul.bf16.gmra.mxu0 %v875
      %v1431 = vpop.f32.mrf.mxu0
      %v1432 = vadd.f32 %v1374, %v1431
      %v1433 = vpop.f32.mrf.mxu0
      %v1434 = vadd.f32 %v1376, %v1433
      %1435 = vmatmul.bf16.gmra.mxu0 %v879
      %v1436 = vpop.f32.mrf.mxu0
      %v1437 = vadd.f32 %v1379, %v1436
      %v1438 = vpop.f32.mrf.mxu0
      %v1439 = vadd.f32 %v1381, %v1438
      %1440 = vmatmul.bf16.gmra.mxu0 %v883
      %v1441 = vpop.f32.mrf.mxu0
      %v1442 = vadd.f32 %v1384, %v1441
      %v1443 = vpop.f32.mrf.mxu0
      %v1444 = vadd.f32 %v1386, %v1443
      %1445 = vmatmul.bf16.gmra.mxu0 %v887
      %v1446 = vpop.f32.mrf.mxu0
      %v1447 = vadd.f32 %v1389, %v1446
      %v1448 = vpop.f32.mrf.mxu0
      %v1449 = vadd.f32 %v1391, %v1448
      %1450 = vmatmul.bf16.gmra.mxu0 %v891
      %v1451 = vpop.f32.mrf.mxu0
      %v1452 = vadd.f32 %v1394, %v1451
      %v1453 = vpop.f32.mrf.mxu0
      %v1454 = vadd.f32 %v1396, %v1453
      %1455 = vmatmul.bf16.gmra.mxu0 %v895
      %v1456 = vpop.f32.mrf.mxu0
      %v1457 = vadd.f32 %v1399, %v1456
      %v1458 = vpop.f32.mrf.mxu0
      %v1459 = vadd.f32 %v1401, %v1458
      %1460 = vmatmul.bf16.gmra.mxu0 %v899
      %v1461 = vpop.f32.mrf.mxu0
      %v1462 = vadd.f32 %v1404, %v1461
      %v1463 = vpop.f32.mrf.mxu0
      %1464 = vdwg.mxu0
      %1465 = vmatpush.bf16.msra.mxu0 %v1225
      %1466 = vmatpush.bf16.msra.mxu0 %v1223
      %1467 = vmatpush.bf16.msra.mxu0 %v1221
      %1468 = vmatpush.bf16.msra.mxu0 %v1219
      %1469 = vmatpush.bf16.msra.mxu0 %v1217
      %1470 = vmatpush.bf16.msra.mxu0 %v1215
      %1471 = vmatpush.bf16.msra.mxu0 %v1213
      %1472 = vmatpush.bf16.msra.mxu0 %v1211
      %1473 = vmatmul.bf16.gmra.mxu0 %v864
      %v1474 = vpop.f32.mrf.mxu0
      %v1475 = vadd.f32 %v1417, %v1474
      %v1476 = vpop.f32.mrf.mxu0
      %v1477 = vadd.f32 %v1419, %v1476
      %1478 = vmatmul.bf16.gmra.mxu0 %v868
      %v1479 = vpop.f32.mrf.mxu0
      %v1480 = vadd.f32 %v1422, %v1479
      %v1481 = vpop.f32.mrf.mxu0
      %v1482 = vadd.f32 %v1424, %v1481
      %1483 = vmatmul.bf16.gmra.mxu0 %v872
      %v1484 = vpop.f32.mrf.mxu0
      %v1485 = vadd.f32 %v1427, %v1484
      %v1486 = vpop.f32.mrf.mxu0
      %v1487 = vadd.f32 %v1429, %v1486
      %1488 = vmatmul.bf16.gmra.mxu0 %v876
      %v1489 = vpop.f32.mrf.mxu0
      %v1490 = vadd.f32 %v1432, %v1489
      %v1491 = vpop.f32.mrf.mxu0
      %v1492 = vadd.f32 %v1434, %v1491
      %1493 = vmatmul.bf16.gmra.mxu0 %v880
      %v1494 = vpop.f32.mrf.mxu0
      %v1495 = vadd.f32 %v1437, %v1494
      %v1496 = vpop.f32.mrf.mxu0
      %v1497 = vadd.f32 %v1439, %v1496
      %1498 = vmatmul.bf16.gmra.mxu0 %v884
      %v1499 = vpop.f32.mrf.mxu0
      %v1500 = vadd.f32 %v1442, %v1499
      %v1501 = vpop.f32.mrf.mxu0
      %v1502 = vadd.f32 %v1444, %v1501
      %1503 = vmatmul.bf16.gmra.mxu0 %v888
      %v1504 = vpop.f32.mrf.mxu0
      %v1505 = vadd.f32 %v1447, %v1504
      %v1506 = vpop.f32.mrf.mxu0
      %v1507 = vadd.f32 %v1449, %v1506
      %1508 = vmatmul.bf16.gmra.mxu0 %v892
      %v1509 = vpop.f32.mrf.mxu0
      %v1510 = vadd.f32 %v1452, %v1509
      %v1511 = vpop.f32.mrf.mxu0
      %v1512 = vadd.f32 %v1454, %v1511
      %1513 = vmatmul.bf16.gmra.mxu0 %v896
      %v1514 = vpop.f32.mrf.mxu0
      %v1515 = vadd.f32 %v1457, %v1514
      %v1516 = vpop.f32.mrf.mxu0
      %v1517 = vadd.f32 %v1459, %v1516
      %1518 = vmatmul.bf16.gmra.mxu0 %v900
      %v1519 = vpop.f32.mrf.mxu0
      %v1520 = vadd.f32 %v1462, %v1519
      %v1521 = vpop.f32.mrf.mxu0
      %1522 = vdwg.mxu0
      %1523 = vmatpush.bf16.msra.mxu0 %v1178
      %1524 = vmatpush.bf16.msra.mxu0 %v1176
      %1525 = vmatpush.bf16.msra.mxu0 %v1174
      %1526 = vmatpush.bf16.msra.mxu0 %v1172
      %1527 = vmatpush.bf16.msra.mxu0 %v1170
      %1528 = vmatpush.bf16.msra.mxu0 %v1168
      %1529 = vmatpush.bf16.msra.mxu0 %v1166
      %1530 = vmatpush.bf16.msra.mxu0 %v1164
      %1531 = vmatmul.bf16.gmra.mxu0 %v861
      %v1532 = vpop.f32.mrf.mxu0
      %v1533 = vadd.f32 %v968, %v1532
      %v1534 = vpop.f32.mrf.mxu0
      %v1535 = vadd.f32 %v968, %v1534
      %1536 = vmatmul.bf16.gmra.mxu0 %v865
      %v1537 = vpop.f32.mrf.mxu0
      %v1538 = vadd.f32 %v968, %v1537
      %v1539 = vpop.f32.mrf.mxu0
      %v1540 = vadd.f32 %v968, %v1539
      %1541 = vmatmul.bf16.gmra.mxu0 %v869
      %v1542 = vpop.f32.mrf.mxu0
      %v1543 = vadd.f32 %v968, %v1542
      %v1544 = vpop.f32.mrf.mxu0
      %v1545 = vadd.f32 %v968, %v1544
      %1546 = vmatmul.bf16.gmra.mxu0 %v873
      %v1547 = vpop.f32.mrf.mxu0
      %v1548 = vadd.f32 %v968, %v1547
      %v1549 = vpop.f32.mrf.mxu0
      %v1550 = vadd.f32 %v968, %v1549
      %1551 = vmatmul.bf16.gmra.mxu0 %v877
      %v1552 = vpop.f32.mrf.mxu0
      %v1553 = vadd.f32 %v968, %v1552
      %v1554 = vpop.f32.mrf.mxu0
      %v1555 = vadd.f32 %v968, %v1554
      %1556 = vmatmul.bf16.gmra.mxu0 %v881
      %v1557 = vpop.f32.mrf.mxu0
      %v1558 = vadd.f32 %v968, %v1557
      %v1559 = vpop.f32.mrf.mxu0
      %v1560 = vadd.f32 %v968, %v1559
      %1561 = vmatmul.bf16.gmra.mxu0 %v885
      %v1562 = vpop.f32.mrf.mxu0
      %v1563 = vadd.f32 %v968, %v1562
      %v1564 = vpop.f32.mrf.mxu0
      %v1565 = vadd.f32 %v968, %v1564
      %1566 = vmatmul.bf16.gmra.mxu0 %v889
      %v1567 = vpop.f32.mrf.mxu0
      %v1568 = vadd.f32 %v968, %v1567
      %v1569 = vpop.f32.mrf.mxu0
      %v1570 = vadd.f32 %v968, %v1569
      %1571 = vmatmul.bf16.gmra.mxu0 %v893
      %v1572 = vpop.f32.mrf.mxu0
      %v1573 = vadd.f32 %v968, %v1572
      %v1574 = vpop.f32.mrf.mxu0
      %v1575 = vadd.f32 %v968, %v1574
      %1576 = vmatmul.bf16.gmra.mxu0 %v897
      %v1577 = vpop.f32.mrf.mxu0
      %v1578 = vadd.f32 %v968, %v1577
      %v1579 = vpop.f32.mrf.mxu0
      %1580 = vdwg.mxu0
      %1581 = vmatpush.bf16.msra.mxu0 %v1194
      %1582 = vmatpush.bf16.msra.mxu0 %v1192
      %1583 = vmatpush.bf16.msra.mxu0 %v1190
      %1584 = vmatpush.bf16.msra.mxu0 %v1188
      %1585 = vmatpush.bf16.msra.mxu0 %v1186
      %1586 = vmatpush.bf16.msra.mxu0 %v1184
      %1587 = vmatpush.bf16.msra.mxu0 %v1182
      %1588 = vmatpush.bf16.msra.mxu0 %v1180
      %1589 = vmatmul.bf16.gmra.mxu0 %v862
      %v1590 = vpop.f32.mrf.mxu0
      %v1591 = vadd.f32 %v1533, %v1590
      %v1592 = vpop.f32.mrf.mxu0
      %v1593 = vadd.f32 %v1535, %v1592
      %1594 = vmatmul.bf16.gmra.mxu0 %v866
      %v1595 = vpop.f32.mrf.mxu0
      %v1596 = vadd.f32 %v1538, %v1595
      %v1597 = vpop.f32.mrf.mxu0
      %v1598 = vadd.f32 %v1540, %v1597
      %1599 = vmatmul.bf16.gmra.mxu0 %v870
      %v1600 = vpop.f32.mrf.mxu0
      %v1601 = vadd.f32 %v1543, %v1600
      %v1602 = vpop.f32.mrf.mxu0
      %v1603 = vadd.f32 %v1545, %v1602
      %1604 = vmatmul.bf16.gmra.mxu0 %v874
      %v1605 = vpop.f32.mrf.mxu0
      %v1606 = vadd.f32 %v1548, %v1605
      %v1607 = vpop.f32.mrf.mxu0
      %v1608 = vadd.f32 %v1550, %v1607
      %1609 = vmatmul.bf16.gmra.mxu0 %v878
      %v1610 = vpop.f32.mrf.mxu0
      %v1611 = vadd.f32 %v1553, %v1610
      %v1612 = vpop.f32.mrf.mxu0
      %v1613 = vadd.f32 %v1555, %v1612
      %1614 = vmatmul.bf16.gmra.mxu0 %v882
      %v1615 = vpop.f32.mrf.mxu0
      %v1616 = vadd.f32 %v1558, %v1615
      %v1617 = vpop.f32.mrf.mxu0
      %v1618 = vadd.f32 %v1560, %v1617
      %1619 = vmatmul.bf16.gmra.mxu0 %v886
      %v1620 = vpop.f32.mrf.mxu0
      %v1621 = vadd.f32 %v1563, %v1620
      %v1622 = vpop.f32.mrf.mxu0
      %v1623 = vadd.f32 %v1565, %v1622
      %1624 = vmatmul.bf16.gmra.mxu0 %v890
      %v1625 = vpop.f32.mrf.mxu0
      %v1626 = vadd.f32 %v1568, %v1625
      %v1627 = vpop.f32.mrf.mxu0
      %v1628 = vadd.f32 %v1570, %v1627
      %1629 = vmatmul.bf16.gmra.mxu0 %v894
      %v1630 = vpop.f32.mrf.mxu0
      %v1631 = vadd.f32 %v1573, %v1630
      %v1632 = vpop.f32.mrf.mxu0
      %v1633 = vadd.f32 %v1575, %v1632
      %1634 = vmatmul.bf16.gmra.mxu0 %v898
      %v1635 = vpop.f32.mrf.mxu0
      %v1636 = vadd.f32 %v1578, %v1635
      %v1637 = vpop.f32.mrf.mxu0
      %1638 = vdwg.mxu0
      %1639 = vmatpush.bf16.msra.mxu0 %v1210
      %1640 = vmatpush.bf16.msra.mxu0 %v1208
      %1641 = vmatpush.bf16.msra.mxu0 %v1206
      %1642 = vmatpush.bf16.msra.mxu0 %v1204
      %1643 = vmatpush.bf16.msra.mxu0 %v1202
      %1644 = vmatpush.bf16.msra.mxu0 %v1200
      %1645 = vmatpush.bf16.msra.mxu0 %v1198
      %1646 = vmatpush.bf16.msra.mxu0 %v1196
      %1647 = vmatmul.bf16.gmra.mxu0 %v863
      %v1648 = vpop.f32.mrf.mxu0
      %v1649 = vadd.f32 %v1591, %v1648
      %v1650 = vpop.f32.mrf.mxu0
      %v1651 = vadd.f32 %v1593, %v1650
      %1652 = vmatmul.bf16.gmra.mxu0 %v867
      %v1653 = vpop.f32.mrf.mxu0
      %v1654 = vadd.f32 %v1596, %v1653
      %v1655 = vpop.f32.mrf.mxu0
      %v1656 = vadd.f32 %v1598, %v1655
      %1657 = vmatmul.bf16.gmra.mxu0 %v871
      %v1658 = vpop.f32.mrf.mxu0
      %v1659 = vadd.f32 %v1601, %v1658
      %v1660 = vpop.f32.mrf.mxu0
      %v1661 = vadd.f32 %v1603, %v1660
      %1662 = vmatmul.bf16.gmra.mxu0 %v875
      %v1663 = vpop.f32.mrf.mxu0
      %v1664 = vadd.f32 %v1606, %v1663
      %v1665 = vpop.f32.mrf.mxu0
      %v1666 = vadd.f32 %v1608, %v1665
      %1667 = vmatmul.bf16.gmra.mxu0 %v879
      %v1668 = vpop.f32.mrf.mxu0
      %v1669 = vadd.f32 %v1611, %v1668
      %v1670 = vpop.f32.mrf.mxu0
      %v1671 = vadd.f32 %v1613, %v1670
      %1672 = vmatmul.bf16.gmra.mxu0 %v883
      %v1673 = vpop.f32.mrf.mxu0
      %v1674 = vadd.f32 %v1616, %v1673
      %v1675 = vpop.f32.mrf.mxu0
      %v1676 = vadd.f32 %v1618, %v1675
      %1677 = vmatmul.bf16.gmra.mxu0 %v887
      %v1678 = vpop.f32.mrf.mxu0
      %v1679 = vadd.f32 %v1621, %v1678
      %v1680 = vpop.f32.mrf.mxu0
      %v1681 = vadd.f32 %v1623, %v1680
      %1682 = vmatmul.bf16.gmra.mxu0 %v891
      %v1683 = vpop.f32.mrf.mxu0
      %v1684 = vadd.f32 %v1626, %v1683
      %v1685 = vpop.f32.mrf.mxu0
      %v1686 = vadd.f32 %v1628, %v1685
      %1687 = vmatmul.bf16.gmra.mxu0 %v895
      %v1688 = vpop.f32.mrf.mxu0
      %v1689 = vadd.f32 %v1631, %v1688
      %v1690 = vpop.f32.mrf.mxu0
      %v1691 = vadd.f32 %v1633, %v1690
      %1692 = vmatmul.bf16.gmra.mxu0 %v899
      %v1693 = vpop.f32.mrf.mxu0
      %v1694 = vadd.f32 %v1636, %v1693
      %v1695 = vpop.f32.mrf.mxu0
      %1696 = vdwg.mxu0
      %1697 = vmatpush.bf16.msra.mxu0 %v1226
      %1698 = vmatpush.bf16.msra.mxu0 %v1224
      %1699 = vmatpush.bf16.msra.mxu0 %v1222
      %1700 = vmatpush.bf16.msra.mxu0 %v1220
      %1701 = vmatpush.bf16.msra.mxu0 %v1218
      %1702 = vmatpush.bf16.msra.mxu0 %v1216
      %1703 = vmatpush.bf16.msra.mxu0 %v1214
      %1704 = vmatpush.bf16.msra.mxu0 %v1212
      %1705 = vmatmul.bf16.gmra.mxu0 %v864
      %v1706 = vpop.f32.mrf.mxu0
      %v1707 = vadd.f32 %v1649, %v1706
      %v1708 = vpop.f32.mrf.mxu0
      %v1709 = vadd.f32 %v1651, %v1708
      %1710 = vmatmul.bf16.gmra.mxu0 %v868
      %v1711 = vpop.f32.mrf.mxu0
      %v1712 = vadd.f32 %v1654, %v1711
      %v1713 = vpop.f32.mrf.mxu0
      %v1714 = vadd.f32 %v1656, %v1713
      %1715 = vmatmul.bf16.gmra.mxu0 %v872
      %v1716 = vpop.f32.mrf.mxu0
      %v1717 = vadd.f32 %v1659, %v1716
      %v1718 = vpop.f32.mrf.mxu0
      %v1719 = vadd.f32 %v1661, %v1718
      %1720 = vmatmul.bf16.gmra.mxu0 %v876
      %v1721 = vpop.f32.mrf.mxu0
      %v1722 = vadd.f32 %v1664, %v1721
      %v1723 = vpop.f32.mrf.mxu0
      %v1724 = vadd.f32 %v1666, %v1723
      %1725 = vmatmul.bf16.gmra.mxu0 %v880
      %v1726 = vpop.f32.mrf.mxu0
      %v1727 = vadd.f32 %v1669, %v1726
      %v1728 = vpop.f32.mrf.mxu0
      %v1729 = vadd.f32 %v1671, %v1728
      %1730 = vmatmul.bf16.gmra.mxu0 %v884
      %v1731 = vpop.f32.mrf.mxu0
      %v1732 = vadd.f32 %v1674, %v1731
      %v1733 = vpop.f32.mrf.mxu0
      %v1734 = vadd.f32 %v1676, %v1733
      %1735 = vmatmul.bf16.gmra.mxu0 %v888
      %v1736 = vpop.f32.mrf.mxu0
      %v1737 = vadd.f32 %v1679, %v1736
      %v1738 = vpop.f32.mrf.mxu0
      %v1739 = vadd.f32 %v1681, %v1738
      %1740 = vmatmul.bf16.gmra.mxu0 %v892
      %v1741 = vpop.f32.mrf.mxu0
      %v1742 = vadd.f32 %v1684, %v1741
      %v1743 = vpop.f32.mrf.mxu0
      %v1744 = vadd.f32 %v1686, %v1743
      %1745 = vmatmul.bf16.gmra.mxu0 %v896
      %v1746 = vpop.f32.mrf.mxu0
      %v1747 = vadd.f32 %v1689, %v1746
      %v1748 = vpop.f32.mrf.mxu0
      %v1749 = vadd.f32 %v1691, %v1748
      %1750 = vmatmul.bf16.gmra.mxu0 %v900
      %v1751 = vpop.f32.mrf.mxu0
      %v1752 = vadd.f32 %v1694, %v1751
      %v1753 = vpop.f32.mrf.mxu0
      %1754 = vdwg.mxu0
      %vm1755 = vcmp.gt.f32.partialorder %v1475, 0.0
      %vm1756 = vcmp.gt.f32.partialorder %v1707, 0.0
      %vm1757 = vcmp.gt.f32.partialorder %v1477, 0.0
      %vm1758 = vcmp.gt.f32.partialorder %v1709, 0.0
      %vm1759 = vcmp.gt.f32.partialorder %v1480, 0.0
      %vm1760 = vcmp.gt.f32.partialorder %v1712, 0.0
      %vm1761 = vcmp.gt.f32.partialorder %v1482, 0.0
      %vm1762 = vcmp.gt.f32.partialorder %v1714, 0.0
      %vm1763 = vcmp.gt.f32.partialorder %v1485, 0.0
      %vm1764 = vcmp.gt.f32.partialorder %v1717, 0.0
      %vm1765 = vcmp.gt.f32.partialorder %v1487, 0.0
      %vm1766 = vcmp.gt.f32.partialorder %v1719, 0.0
      %vm1767 = vcmp.gt.f32.partialorder %v1490, 0.0
      %vm1768 = vcmp.gt.f32.partialorder %v1722, 0.0
      %vm1769 = vcmp.gt.f32.partialorder %v1492, 0.0
      %vm1770 = vcmp.gt.f32.partialorder %v1724, 0.0
      %vm1771 = vcmp.gt.f32.partialorder %v1495, 0.0
      %vm1772 = vcmp.gt.f32.partialorder %v1727, 0.0
      %vm1773 = vcmp.gt.f32.partialorder %v1497, 0.0
      %vm1774 = vcmp.gt.f32.partialorder %v1729, 0.0
      %vm1775 = vcmp.gt.f32.partialorder %v1500, 0.0
      %vm1776 = vcmp.gt.f32.partialorder %v1732, 0.0
      %vm1777 = vcmp.gt.f32.partialorder %v1502, 0.0
      %vm1778 = vcmp.gt.f32.partialorder %v1734, 0.0
      %vm1779 = vcmp.gt.f32.partialorder %v1505, 0.0
      %vm1780 = vcmp.gt.f32.partialorder %v1737, 0.0
      %vm1781 = vcmp.gt.f32.partialorder %v1507, 0.0
      %vm1782 = vcmp.gt.f32.partialorder %v1739, 0.0
      %vm1783 = vcmp.gt.f32.partialorder %v1510, 0.0
      %vm1784 = vcmp.gt.f32.partialorder %v1742, 0.0
      %vm1785 = vcmp.gt.f32.partialorder %v1512, 0.0
      %vm1786 = vcmp.gt.f32.partialorder %v1744, 0.0
      %vm1787 = vcmp.gt.f32.partialorder %v1515, 0.0
      %vm1788 = vcmp.gt.f32.partialorder %v1747, 0.0
      %vm1789 = vcmp.gt.f32.partialorder %v1517, 0.0
      %vm1790 = vcmp.gt.f32.partialorder %v1749, 0.0
      %vm1791 = vcmp.gt.f32.partialorder %v1520, 0.0
      %vm1792 = vcmp.gt.f32.partialorder %v1752, 0.0
      %v1793 = vmul.f32 %v1475, 0.2
      %v1794 = vmul.f32 %v1707, 0.2
      %v1795 = vmul.f32 %v1477, 0.2
      %v1796 = vmul.f32 %v1709, 0.2
      %v1797 = vmul.f32 %v1480, 0.2
      %v1798 = vmul.f32 %v1712, 0.2
      %v1799 = vmul.f32 %v1482, 0.2
      %v1800 = vmul.f32 %v1714, 0.2
      %v1801 = vmul.f32 %v1485, 0.2
      %v1802 = vmul.f32 %v1717, 0.2
      %v1803 = vmul.f32 %v1487, 0.2
      %v1804 = vmul.f32 %v1719, 0.2
      %v1805 = vmul.f32 %v1490, 0.2
      %v1806 = vmul.f32 %v1722, 0.2
      %v1807 = vmul.f32 %v1492, 0.2
      %v1808 = vmul.f32 %v1724, 0.2
      %v1809 = vmul.f32 %v1495, 0.2
      %v1810 = vmul.f32 %v1727, 0.2
      %v1811 = vmul.f32 %v1497, 0.2
      %v1812 = vmul.f32 %v1729, 0.2
      %v1813 = vmul.f32 %v1500, 0.2
      %v1814 = vmul.f32 %v1732, 0.2
      %v1815 = vmul.f32 %v1502, 0.2
      %v1816 = vmul.f32 %v1734, 0.2
      %v1817 = vmul.f32 %v1505, 0.2
      %v1818 = vmul.f32 %v1737, 0.2
      %v1819 = vmul.f32 %v1507, 0.2
      %v1820 = vmul.f32 %v1739, 0.2
      %v1821 = vmul.f32 %v1510, 0.2
      %v1822 = vmul.f32 %v1742, 0.2
      %v1823 = vmul.f32 %v1512, 0.2
      %v1824 = vmul.f32 %v1744, 0.2
      %v1825 = vmul.f32 %v1515, 0.2
      %v1826 = vmul.f32 %v1747, 0.2
      %v1827 = vmul.f32 %v1517, 0.2
      %v1828 = vmul.f32 %v1749, 0.2
      %v1829 = vmul.f32 %v1520, 0.2
      %v1830 = vmul.f32 %v1752, 0.2
      %v1831 = vsel %vm1755, %v1475, %v1793
      %v1832 = vsel %vm1756, %v1707, %v1794
      %v1833 = vsel %vm1757, %v1477, %v1795
      %v1834 = vsel %vm1758, %v1709, %v1796
      %v1835 = vsel %vm1759, %v1480, %v1797
      %v1836 = vsel %vm1760, %v1712, %v1798
      %v1837 = vsel %vm1761, %v1482, %v1799
      %v1838 = vsel %vm1762, %v1714, %v1800
      %v1839 = vsel %vm1763, %v1485, %v1801
      %v1840 = vsel %vm1764, %v1717, %v1802
      %v1841 = vsel %vm1765, %v1487, %v1803
      %v1842 = vsel %vm1766, %v1719, %v1804
      %v1843 = vsel %vm1767, %v1490, %v1805
      %v1844 = vsel %vm1768, %v1722, %v1806
      %v1845 = vsel %vm1769, %v1492, %v1807
      %v1846 = vsel %vm1770, %v1724, %v1808
      %v1847 = vsel %vm1771, %v1495, %v1809
      %v1848 = vsel %vm1772, %v1727, %v1810
      %v1849 = vsel %vm1773, %v1497, %v1811
      %v1850 = vsel %vm1774, %v1729, %v1812
      %v1851 = vsel %vm1775, %v1500, %v1813
      %v1852 = vsel %vm1776, %v1732, %v1814
      %v1853 = vsel %vm1777, %v1502, %v1815
      %v1854 = vsel %vm1778, %v1734, %v1816
      %v1855 = vsel %vm1779, %v1505, %v1817
      %v1856 = vsel %vm1780, %v1737, %v1818
      %v1857 = vsel %vm1781, %v1507, %v1819
      %v1858 = vsel %vm1782, %v1739, %v1820
      %v1859 = vsel %vm1783, %v1510, %v1821
      %v1860 = vsel %vm1784, %v1742, %v1822
      %v1861 = vsel %vm1785, %v1512, %v1823
      %v1862 = vsel %vm1786, %v1744, %v1824
      %v1863 = vsel %vm1787, %v1515, %v1825
      %v1864 = vsel %vm1788, %v1747, %v1826
      %v1865 = vsel %vm1789, %v1517, %v1827
      %v1866 = vsel %vm1790, %v1749, %v1828
      %v1867 = vsel %vm1791, %v1520, %v1829
      %v1868 = vsel %vm1792, %v1752, %v1830
      %v1869 = vpack.c.bf16 %v1833, %v1831
      %v1870 = vpack.c.bf16 %v1834, %v1832
      %v1871 = vpack.c.bf16 %v1837, %v1835
      %v1872 = vpack.c.bf16 %v1838, %v1836
      %v1873 = vpack.c.bf16 %v1841, %v1839
      %v1874 = vpack.c.bf16 %v1842, %v1840
      %v1875 = vpack.c.bf16 %v1845, %v1843
      %v1876 = vpack.c.bf16 %v1846, %v1844
      %v1877 = vpack.c.bf16 %v1849, %v1847
      %v1878 = vpack.c.bf16 %v1850, %v1848
      %v1879 = vpack.c.bf16 %v1853, %v1851
      %v1880 = vpack.c.bf16 %v1854, %v1852
      %v1881 = vpack.c.bf16 %v1857, %v1855
      %v1882 = vpack.c.bf16 %v1858, %v1856
      %v1883 = vpack.c.bf16 %v1861, %v1859
      %v1884 = vpack.c.bf16 %v1862, %v1860
      %v1885 = vpack.c.bf16 %v1865, %v1863
      %v1886 = vpack.c.bf16 %v1866, %v1864
      %v1887 = vpack.c.bf16 %v1867, %v1867
      %v1888 = vpack.c.bf16 %v1868, %v1868
      %v1889 = vld [vmem:[%s5] sm:$0xf]
      %v1890 = vld [vmem:[%s5 + $0x4] sm:$0xf]
      %v1891 = vld [vmem:[%s5 + $0x8] sm:$0xf]
      %v1892 = vld [vmem:[%s5 + $0xc] sm:$0xf]
      %v1893 = vld [vmem:[%s5 + $0x10] sm:$0xf]
      %v1894 = vld [vmem:[%s5 + $0x14] sm:$0xf]
      %v1895 = vld [vmem:[%s5 + $0x18] sm:$0xf]
      %v1896 = vld [vmem:[%s5 + $0x1c] sm:$0xf]
      %v1897 = vld [vmem:[%s5 + $0x20] sm:$0xf]
      %v1898 = vld [vmem:[%s5 + $0x24] sm:$0xf]
      %v1899 = vld [vmem:[%s5 + $0x28] sm:$0xf]
      %v1900 = vld [vmem:[%s5 + $0x2c] sm:$0xf]
      %v1901 = vld [vmem:[%s5 + $0x30] sm:$0xf]
      %v1902 = vld [vmem:[%s5 + $0x34] sm:$0xf]
      %v1903 = vld [vmem:[%s5 + $0x38] sm:$0xf]
      %v1904 = vld [vmem:[%s5 + $0x3c] sm:$0xf]
      %v1905 = vld [vmem:[%s5 + $0x40] sm:$0xf]
      %v1906 = vld [vmem:[%s5 + $0x44] sm:$0xf]
      %v1907 = vld [vmem:[%s5 + $0x48] sm:$0xf]
      %v1908 = vld [vmem:[%s5 + $0x4c] sm:$0xf]
      %v1909 = vld [vmem:[%s5 + $0x50] sm:$0xf]
      %v1910 = vld [vmem:[%s5 + $0x54] sm:$0xf]
      %v1911 = vld [vmem:[%s5 + $0x58] sm:$0xf]
      %v1912 = vld [vmem:[%s5 + $0x5c] sm:$0xf]
      %v1913 = vld [vmem:[%s5 + $0x60] sm:$0xf]
      %v1914 = vld [vmem:[%s5 + $0x64] sm:$0xf]
      %v1915 = vld [vmem:[%s5 + $0x68] sm:$0xf]
      %v1916 = vld [vmem:[%s5 + $0x6c] sm:$0xf]
      %v1917 = vld [vmem:[%s5 + $0x70] sm:$0xf]
      %v1918 = vld [vmem:[%s5 + $0x74] sm:$0xf]
      %v1919 = vld [vmem:[%s5 + $0x78] sm:$0xf]
      %v1920 = vld [vmem:[%s5 + $0x7c] sm:$0xf]
      %v1921 = vld [vmem:[%s6] sm:$0x1]
      %v1923 = vperm.slane %v1921, 0
      %v1957 = vunpack.c.l.b16 %v1889
      %v1958 = vunpack.c.l.b16 %v1890
      %v1959 = vunpack.c.l.b16 %v1891
      %v1960 = vunpack.c.l.b16 %v1892
      %v1961 = vunpack.c.l.b16 %v1893
      %v1962 = vunpack.c.l.b16 %v1894
      %v1963 = vunpack.c.l.b16 %v1895
      %v1964 = vunpack.c.l.b16 %v1896
      %v1965 = vunpack.c.l.b16 %v1897
      %v1966 = vunpack.c.l.b16 %v1898
      %v1967 = vunpack.c.l.b16 %v1899
      %v1968 = vunpack.c.l.b16 %v1900
      %v1969 = vunpack.c.l.b16 %v1901
      %v1970 = vunpack.c.l.b16 %v1902
      %v1971 = vunpack.c.l.b16 %v1903
      %v1972 = vunpack.c.l.b16 %v1904
      %v1973 = vunpack.c.l.b16 %v1905
      %v1974 = vunpack.c.l.b16 %v1906
      %v1975 = vunpack.c.l.b16 %v1907
      %v1976 = vunpack.c.l.b16 %v1908
      %v1977 = vunpack.c.l.b16 %v1909
      %v1978 = vunpack.c.l.b16 %v1910
      %v1979 = vunpack.c.l.b16 %v1911
      %v1980 = vunpack.c.l.b16 %v1912
      %v1981 = vunpack.c.l.b16 %v1913
      %v1982 = vunpack.c.l.b16 %v1914
      %v1983 = vunpack.c.l.b16 %v1915
      %v1984 = vunpack.c.l.b16 %v1916
      %v1985 = vunpack.c.l.b16 %v1917
      %v1986 = vunpack.c.l.b16 %v1918
      %v1987 = vunpack.c.l.b16 %v1919
      %v1988 = vunpack.c.l.b16 %v1920
      %v1989 = vpack.c.b16 %v1958, %v1957
      %v1990 = vpack.c.b16 %v1960, %v1959
      %v1991 = vpack.c.b16 %v1962, %v1961
      %v1992 = vpack.c.b16 %v1964, %v1963
      %v1993 = vpack.c.b16 %v1966, %v1965
      %v1994 = vpack.c.b16 %v1968, %v1967
      %v1995 = vpack.c.b16 %v1970, %v1969
      %v1996 = vpack.c.b16 %v1972, %v1971
      %v1997 = vpack.c.b16 %v1974, %v1973
      %v1998 = vpack.c.b16 %v1976, %v1975
      %v1999 = vpack.c.b16 %v1978, %v1977
      %v2000 = vpack.c.b16 %v1980, %v1979
      %v2001 = vpack.c.b16 %v1982, %v1981
      %v2002 = vpack.c.b16 %v1984, %v1983
      %v2003 = vpack.c.b16 %v1986, %v1985
      %v2004 = vpack.c.b16 %v1988, %v1987
      %2021 = vmatpush.bf16.msra.mxu0 %v1996
      %2022 = vmatpush.bf16.msra.mxu0 %v1995
      %2023 = vmatpush.bf16.msra.mxu0 %v1994
      %2024 = vmatpush.bf16.msra.mxu0 %v1993
      %2025 = vmatpush.bf16.msra.mxu0 %v1992
      %2026 = vmatpush.bf16.msra.mxu0 %v1991
      %2027 = vmatpush.bf16.msra.mxu0 %v1990
      %2028 = vmatpush.bf16.msra.mxu0 %v1989
      %2029 = vmatmul.bf16.gmra.mxu0 %v1869
      %v2030 = vpop.f32.mrf.mxu0
      %v2031 = vadd.f32 %v1923, %v2030
      %v2032 = vpop.f32.mrf.mxu0
      %v2033 = vadd.f32 %v1923, %v2032
      %2034 = vmatmul.bf16.gmra.mxu0 %v1871
      %v2035 = vpop.f32.mrf.mxu0
      %v2036 = vadd.f32 %v1923, %v2035
      %v2037 = vpop.f32.mrf.mxu0
      %v2038 = vadd.f32 %v1923, %v2037
      %2039 = vmatmul.bf16.gmra.mxu0 %v1873
      %v2040 = vpop.f32.mrf.mxu0
      %v2041 = vadd.f32 %v1923, %v2040
      %v2042 = vpop.f32.mrf.mxu0
      %v2043 = vadd.f32 %v1923, %v2042
      %2044 = vmatmul.bf16.gmra.mxu0 %v1875
      %v2045 = vpop.f32.mrf.mxu0
      %v2046 = vadd.f32 %v1923, %v2045
      %v2047 = vpop.f32.mrf.mxu0
      %v2048 = vadd.f32 %v1923, %v2047
      %2049 = vmatmul.bf16.gmra.mxu0 %v1877
      %v2050 = vpop.f32.mrf.mxu0
      %v2051 = vadd.f32 %v1923, %v2050
      %v2052 = vpop.f32.mrf.mxu0
      %v2053 = vadd.f32 %v1923, %v2052
      %2054 = vmatmul.bf16.gmra.mxu0 %v1879
      %v2055 = vpop.f32.mrf.mxu0
      %v2056 = vadd.f32 %v1923, %v2055
      %v2057 = vpop.f32.mrf.mxu0
      %v2058 = vadd.f32 %v1923, %v2057
      %2059 = vmatmul.bf16.gmra.mxu0 %v1881
      %v2060 = vpop.f32.mrf.mxu0
      %v2061 = vadd.f32 %v1923, %v2060
      %v2062 = vpop.f32.mrf.mxu0
      %v2063 = vadd.f32 %v1923, %v2062
      %2064 = vmatmul.bf16.gmra.mxu0 %v1883
      %v2065 = vpop.f32.mrf.mxu0
      %v2066 = vadd.f32 %v1923, %v2065
      %v2067 = vpop.f32.mrf.mxu0
      %v2068 = vadd.f32 %v1923, %v2067
      %2069 = vmatmul.bf16.gmra.mxu0 %v1885
      %v2070 = vpop.f32.mrf.mxu0
      %v2071 = vadd.f32 %v1923, %v2070
      %v2072 = vpop.f32.mrf.mxu0
      %v2073 = vadd.f32 %v1923, %v2072
      %2074 = vmatmul.bf16.gmra.mxu0 %v1887
      %v2075 = vpop.f32.mrf.mxu0
      %v2076 = vadd.f32 %v1923, %v2075
      %v2077 = vpop.f32.mrf.mxu0
      %2078 = vdwg.mxu0
      %2079 = vmatpush.bf16.msra.mxu0 %v2004
      %2080 = vmatpush.bf16.msra.mxu0 %v2003
      %2081 = vmatpush.bf16.msra.mxu0 %v2002
      %2082 = vmatpush.bf16.msra.mxu0 %v2001
      %2083 = vmatpush.bf16.msra.mxu0 %v2000
      %2084 = vmatpush.bf16.msra.mxu0 %v1999
      %2085 = vmatpush.bf16.msra.mxu0 %v1998
      %2086 = vmatpush.bf16.msra.mxu0 %v1997
      %2087 = vmatmul.bf16.gmra.mxu0 %v1870
      %v2088 = vpop.f32.mrf.mxu0
      %v2089 = vadd.f32 %v2031, %v2088
      %v2090 = vpop.f32.mrf.mxu0
      %v2091 = vadd.f32 %v2033, %v2090
      %2092 = vmatmul.bf16.gmra.mxu0 %v1872
      %v2093 = vpop.f32.mrf.mxu0
      %v2094 = vadd.f32 %v2036, %v2093
      %v2095 = vpop.f32.mrf.mxu0
      %v2096 = vadd.f32 %v2038, %v2095
      %2097 = vmatmul.bf16.gmra.mxu0 %v1874
      %v2098 = vpop.f32.mrf.mxu0
      %v2099 = vadd.f32 %v2041, %v2098
      %v2100 = vpop.f32.mrf.mxu0
      %v2101 = vadd.f32 %v2043, %v2100
      %2102 = vmatmul.bf16.gmra.mxu0 %v1876
      %v2103 = vpop.f32.mrf.mxu0
      %v2104 = vadd.f32 %v2046, %v2103
      %v2105 = vpop.f32.mrf.mxu0
      %v2106 = vadd.f32 %v2048, %v2105
      %2107 = vmatmul.bf16.gmra.mxu0 %v1878
      %v2108 = vpop.f32.mrf.mxu0
      %v2109 = vadd.f32 %v2051, %v2108
      %v2110 = vpop.f32.mrf.mxu0
      %v2111 = vadd.f32 %v2053, %v2110
      %2112 = vmatmul.bf16.gmra.mxu0 %v1880
      %v2113 = vpop.f32.mrf.mxu0
      %v2114 = vadd.f32 %v2056, %v2113
      %v2115 = vpop.f32.mrf.mxu0
      %v2116 = vadd.f32 %v2058, %v2115
      %2117 = vmatmul.bf16.gmra.mxu0 %v1882
      %v2118 = vpop.f32.mrf.mxu0
      %v2119 = vadd.f32 %v2061, %v2118
      %v2120 = vpop.f32.mrf.mxu0
      %v2121 = vadd.f32 %v2063, %v2120
      %2122 = vmatmul.bf16.gmra.mxu0 %v1884
      %v2123 = vpop.f32.mrf.mxu0
      %v2124 = vadd.f32 %v2066, %v2123
      %v2125 = vpop.f32.mrf.mxu0
      %v2126 = vadd.f32 %v2068, %v2125
      %2127 = vmatmul.bf16.gmra.mxu0 %v1886
      %v2128 = vpop.f32.mrf.mxu0
      %v2129 = vadd.f32 %v2071, %v2128
      %v2130 = vpop.f32.mrf.mxu0
      %v2131 = vadd.f32 %v2073, %v2130
      %2132 = vmatmul.bf16.gmra.mxu0 %v1888
      %v2133 = vpop.f32.mrf.mxu0
      %v2134 = vadd.f32 %v2076, %v2133
      %v2135 = vpop.f32.mrf.mxu0
      %2136 = vdwg.mxu0
      %v2137 = vpack.c.bf16 %v2089, %v2089
      %v2138 = vpack.c.bf16 %v2091, %v2091
      %v2139 = vpack.c.bf16 %v2094, %v2094
      %v2140 = vpack.c.bf16 %v2096, %v2096
      %v2141 = vpack.c.bf16 %v2099, %v2099
      %v2142 = vpack.c.bf16 %v2101, %v2101
      %v2143 = vpack.c.bf16 %v2104, %v2104
      %v2144 = vpack.c.bf16 %v2106, %v2106
      %v2145 = vpack.c.bf16 %v2109, %v2109
      %v2146 = vpack.c.bf16 %v2111, %v2111
      %v2147 = vpack.c.bf16 %v2114, %v2114
      %v2148 = vpack.c.bf16 %v2116, %v2116
      %v2149 = vpack.c.bf16 %v2119, %v2119
      %v2150 = vpack.c.bf16 %v2121, %v2121
      %v2151 = vpack.c.bf16 %v2124, %v2124
      %v2152 = vpack.c.bf16 %v2126, %v2126
      %v2153 = vpack.c.bf16 %v2129, %v2129
      %v2154 = vpack.c.bf16 %v2131, %v2131
      %v2155 = vpack.c.bf16 %v2134, %v2134
      %2156 = vst [vmem:[%s280] sm:$0xf] %v2137
      %2157 = vst [vmem:[%s280 + $0x4] sm:$0xf] %v2138
      %2158 = vst [vmem:[%s280 + $0x8] sm:$0xf] %v2139
      %2159 = vst [vmem:[%s280 + $0xc] sm:$0xf] %v2140
      %2160 = vst [vmem:[%s280 + $0x10] sm:$0xf] %v2141
      %2161 = vst [vmem:[%s280 + $0x14] sm:$0xf] %v2142
      %2162 = vst [vmem:[%s280 + $0x18] sm:$0xf] %v2143
      %2163 = vst [vmem:[%s280 + $0x1c] sm:$0xf] %v2144
      %2164 = vst [vmem:[%s280 + $0x20] sm:$0xf] %v2145
      %2165 = vst [vmem:[%s280 + $0x24] sm:$0xf] %v2146
      %2166 = vst [vmem:[%s280 + $0x28] sm:$0xf] %v2147
      %2167 = vst [vmem:[%s280 + $0x2c] sm:$0xf] %v2148
      %2168 = vst [vmem:[%s280 + $0x30] sm:$0xf] %v2149
      %2169 = vst [vmem:[%s280 + $0x34] sm:$0xf] %v2150
      %2170 = vst [vmem:[%s280 + $0x38] sm:$0xf] %v2151
      %2171 = vst [vmem:[%s280 + $0x3c] sm:$0xf] %v2152
      %2172 = vst [vmem:[%s280 + $0x40] sm:$0xf] %v2153
      %2173 = vst [vmem:[%s280 + $0x44] sm:$0xf] %v2154
      %2174 = vst [vmem:[%s280 + $0x48] sm:$0xf] %v2155
      %s2175 = smul.u32 19, %s18
      %p2176 = scmp.lt.s32.totalorder %s2175, 37
      %s2177 = scalar_select %p2176, %s2175, 37
      %s2178 = smul.addr %s2177, 4
      %s2179 = scalar_lea.vmem %s7, %s2178
      // Predicated region
      $region49: #{color_mapper_forward.1} parent=47 // pred_check
        %p2180 = pneg %p188
      $region50: #{color_mapper_forward.1} parent=47 // pred_check_branch
        %2182 = sbr.rel (%p2180) target = $region52
      $region51: #{color_mapper_forward.1} parent=47 // pred_region
        %s2183 = smul.u32 19, %s18
      $region52: #{color_mapper_forward.1} parent=47 // pred_fallthru
        _
    $region48: #{color_mapper_forward.1} parent=5 // pred_fallthru
      _
    %p2184 = scmp.le.s32.totalorder 2, %s13
    // Predicated region
    $region53: #{color_mapper_forward.1} parent=5 // pred_check
      %p2185 = pneg %p2184
    $region54: #{color_mapper_forward.1} parent=5 // pred_check_branch
      %2187 = sbr.rel (%p2185) target = $region56
    $region55: #{color_mapper_forward.1} parent=5 // pred_region
      %s2188 = ssub.s32 %s13, 2
      // Predicated region
      $region57: #{color_mapper_forward.1} parent=55 // pred_check
        %p2189 = pneg %p194
      $region58: #{color_mapper_forward.1} parent=55 // pred_check_branch
        %2191 = sbr.rel (%p2189) target = $region60
      $region59: #{color_mapper_forward.1} parent=55 // pred_region
        %s2192 = smul.u32 19, %s19
        %p2193 = scmp.lt.s32.totalorder %s2192, 37
        %s2194 = scalar_select %p2193, %s2192, 37
        %s2195 = smul.addr %s2194, 4
        %s2196 = scalar_lea.vmem %s7, %s2195
      $region60: #{color_mapper_forward.1} parent=55 // pred_fallthru
        _
    $region56: #{color_mapper_forward.1} parent=5 // pred_fallthru
      _
  $region6: #{color_mapper_forward.1} parent=0 // loop_footer
    %s17 = sadd.s32 1, %s13
  $region7: #{color_mapper_forward.1} parent=0 // loop_footer_branch
    %12 = sbr.rel target = $region3
  $region8: #{color_mapper_forward.1} parent=0 // loop_exit
    _

</llo_original>
